<compile_context>
chip_gen: v5e
topology: v5e:2x2
jax: 0.10.0
libtpu: 0.0.40
codegen_flags: <defaults>
</compile_context>

<pallas_src>
import math

import jax
import jax.numpy as jnp
import numpy as np
from jax.experimental import pallas as pl
from jax.experimental.pallas import tpu as pltpu

# --- model dimensions (small, consistent with the module's forward) ---
B, S, H = 2, 8, 32           # batch, seq_len, hidden_size
NUM_HEADS, DH = 2, 16        # heads, head_dim  (NUM_HEADS * DH == H)
FFN = 64                     # intermediate size
VOCAB = 50
NUM_TYPES = 2
LN_EPS = 1e-12

BS = B * S                              # flattened token count
EMB_ROWS = VOCAB + NUM_TYPES + S        # rows of the packed embedding table (word|type|pos)
VWIDTH = FFN                            # width of the packed bias / LN / classifier slab


def _gelu(v):
    # tanh-approximation GELU (BERT-style)
    return 0.5 * v * (1.0 + jnp.tanh(0.7978845608028654 * (v + 0.044715 * v * v * v)))


def _layernorm(v, g, b):
    mu = jnp.mean(v, axis=-1, keepdims=True)
    var = jnp.mean((v - mu) ** 2, axis=-1, keepdims=True)
    return (v - mu) * jax.lax.rsqrt(var + LN_EPS) * g + b


# ----------------------------------------------------------------------------------
# Pallas kernel: single invocation, whole batch (B*S, H) slab. No grid.
# ----------------------------------------------------------------------------------
def fused_kernel(ids_ref, maskc_ref, maskr_ref,   # token data
                 emb_ref, w1_ref, w2_ref, v_ref,  # packed parameters
                 out_ref,                         # (B, 1) logits
                 ctx_ref):                        # (BS, H) VMEM scratch for attention context
    ids = ids_ref[...]            # (BS, 3) int32: [word_id, VOCAB+type_id, VOCAB+NUM_TYPES+pos]
    maskc = maskc_ref[...]        # (BS, 1) float mask (column form, for pooling)

    def vrow(i, w=H):             # static row slice of the bias/LN/classifier slab
        return v_ref[i:i + 1, 0:w]

    # ---------------- fused embedding lookup: one multi-hot matmul ----------------
    lane = jax.lax.broadcasted_iota(jnp.int32, (BS, EMB_ROWS), 1)
    onehot = ((lane == ids[:, 0:1]).astype(jnp.float32)
              + (lane == ids[:, 1:2]).astype(jnp.float32)
              + (lane == ids[:, 2:3]).astype(jnp.float32))                # (BS, EMB_ROWS)
    x = jnp.dot(onehot, emb_ref[...], preferred_element_type=jnp.float32)  # (BS, H)

    # embedding LayerNorm
    x = _layernorm(x, vrow(0), vrow(1))

    # ---------------- self-attention ----------------
    # Q/K/V projections (1/sqrt(DH) already folded into the Q weight & bias at pack time).
    q = jnp.dot(x, w1_ref[:, 0:H], preferred_element_type=jnp.float32) + vrow(2)
    k = jnp.dot(x, w1_ref[:, H:2 * H], preferred_element_type=jnp.float32) + vrow(3)
    v = jnp.dot(x, w1_ref[:, 2 * H:3 * H], preferred_element_type=jnp.float32) + vrow(4)

    # Static loop over (batch, head); per-head context written straight into VMEM scratch.
    # NOTE: additive -1e9 key masking assumes no query row is fully masked (true for BERT inputs).
    for b in range(B):
        bias = (1.0 - maskr_ref[b:b + 1, :]) * (-1e9)                     # (1, S)
        r0 = b * S
        for h in range(NUM_HEADS):
            c0 = h * DH
            qs = q[r0:r0 + S, c0:c0 + DH]
            ks = k[r0:r0 + S, c0:c0 + DH]
            vs = v[r0:r0 + S, c0:c0 + DH]
            s = jax.lax.dot_general(qs, ks, (((1,), (1,)), ((), ())),
                                    preferred_element_type=jnp.float32) + bias
            m = jnp.max(s, axis=-1, keepdims=True)
            e = jnp.exp(s - m)
            p = e / jnp.sum(e, axis=-1, keepdims=True)
            ctx_ref[r0:r0 + S, c0:c0 + DH] = jnp.dot(
                p, vs, preferred_element_type=jnp.float32)

    attn_out = jnp.dot(ctx_ref[...], w1_ref[:, 3 * H:4 * H],
                       preferred_element_type=jnp.float32) + vrow(5)
    x = _layernorm(x + attn_out, vrow(6), vrow(7))

    # ---------------- feed-forward ----------------
    hmid = _gelu(jnp.dot(x, w1_ref[:, 4 * H:4 * H + FFN],
                         preferred_element_type=jnp.float32) + vrow(8, FFN))
    ffn = jnp.dot(hmid, w2_ref[...], preferred_element_type=jnp.float32) + vrow(9)
    x = _layernorm(x + ffn, vrow(10), vrow(11))

    # ---------------- MeanPooling: mask-weighted mean per sequence (segment-sum matmul) -------
    row_id = jax.lax.broadcasted_iota(jnp.int32, (B, BS), 0) * S
    col_id = jax.lax.broadcasted_iota(jnp.int32, (B, BS), 1)
    pool = ((col_id >= row_id) & (col_id < row_id + S)).astype(jnp.float32)   # (B, BS) block mask
    sum_emb = jnp.dot(pool, x * maskc, preferred_element_type=jnp.float32)    # (B, H)
    sum_mask = jnp.maximum(jnp.dot(pool, maskc, preferred_element_type=jnp.float32),
                           1e-9)                                              # (B, 1) clamp(min=1e-9)
    pooled = sum_emb / sum_mask
    # TODO(synk): nn.Dropout(0.3) is identity at inference/eval time; omitted.

    # ---------------- classifier head (VPU multiply-reduce) ----------------
    logits = jnp.sum(pooled * vrow(12), axis=-1, keepdims=True) + v_ref[13:14, 0:1]  # (B, 1)
    out_ref[...] = logits


# ----------------------------------------------------------------------------------
# Parameter init (deterministic, in-script) — same layout as the original version
# ----------------------------------------------------------------------------------
def init_params(key):
    def nrm(k, shape, scale=0.02):
        return scale * jax.random.normal(k, shape, dtype=jnp.float32)

    ks = jax.random.split(key, 8)
    return dict(
        word_emb=nrm(ks[0], (VOCAB, H)),
        pos_emb=nrm(ks[1], (S, H)),
        type_emb=nrm(ks[2], (NUM_TYPES, H)),
        ln0_g=jnp.ones((1, H), jnp.float32), ln0_b=jnp.zeros((1, H), jnp.float32),
        w_qkv=nrm(ks[3], (H, 3 * H)), b_qkv=jnp.zeros((1, 3 * H), jnp.float32),
        w_ao=nrm(ks[4], (H, H)), b_ao=jnp.zeros((1, H), jnp.float32),
        ln1_g=jnp.ones((1, H), jnp.float32), ln1_b=jnp.zeros((1, H), jnp.float32),
        w_in=nrm(ks[5], (H, FFN)), b_in=jnp.zeros((1, FFN), jnp.float32),
        w_out=nrm(ks[6], (FFN, H)), b_out=jnp.zeros((1, H), jnp.float32),
        ln2_g=jnp.ones((1, H), jnp.float32), ln2_b=jnp.zeros((1, H), jnp.float32),
        w_cls=nrm(ks[7], (H, 1)), b_cls=jnp.zeros((1, 1), jnp.float32),
    )


# ----------------------------------------------------------------------------------
# Host-side packing: 19 tensors -> 4 parameter slabs (done once, outside the hot path)
# ----------------------------------------------------------------------------------
def pack_params(params):
    scale = 1.0 / math.sqrt(DH)
    w_qkv, b_qkv = params["w_qkv"], params["b_qkv"]
    wq = w_qkv[:, 0:H] * scale           # fold attention scale into Q projection
    wk = w_qkv[:, H:2 * H]
    wv = w_qkv[:, 2 * H:3 * H]
    bq = b_qkv[:, 0:H] * scale
    bk = b_qkv[:, H:2 * H]
    bv = b_qkv[:, 2 * H:3 * H]

    emb_slab = jnp.concatenate(
        [params["word_emb"], params["type_emb"], params["pos_emb"]], axis=0)   # (EMB_ROWS, H)
    w1 = jnp.concatenate([wq, wk, wv, params["w_ao"], params["w_in"]], axis=1)  # (H, 4H+FFN)
    w2 = params["w_out"]                                                        # (FFN, H)

    def pad_row(r):
        return jnp.pad(r, ((0, 0), (0, VWIDTH - r.shape[1])))

    rows = [params["ln0_g"], params["ln0_b"], bq, bk, bv, params["b_ao"],
            params["ln1_g"], params["ln1_b"], params["b_in"], params["b_out"],
            params["ln2_g"], params["ln2_b"], params["w_cls"].T, params["b_cls"]]
    vslab = jnp.concatenate([pad_row(r) for r in rows]
                            + [jnp.zeros((2, VWIDTH), jnp.float32)], axis=0)    # (16, VWIDTH)
    return dict(emb_slab=emb_slab, w1=w1, w2=w2, vslab=vslab)


# ----------------------------------------------------------------------------------
# Forward pass (thin glue + single pallas_call)
# ----------------------------------------------------------------------------------
def task2_forward(packed, input_ids, attention_mask, token_type_ids):
    pos_ids = jnp.tile(jnp.arange(S, dtype=jnp.int32), (B,))                      # (BS,)
    ids = jnp.stack([input_ids.reshape(-1).astype(jnp.int32),
                     token_type_ids.reshape(-1).astype(jnp.int32) + VOCAB,
                     pos_ids + VOCAB + NUM_TYPES], axis=1)                        # (BS, 3)
    maskf = attention_mask.astype(jnp.float32)
    maskc = maskf.reshape(BS, 1)                                                  # (BS, 1)
    maskr = maskf.reshape(B, S)                                                   # (B, S)

    out = pl.pallas_call(
        fused_kernel,
        out_shape=jax.ShapeDtypeStruct((B, 1), jnp.float32),
        scratch_shapes=[pltpu.VMEM((BS, H), jnp.float32)],
    )(ids, maskc, maskr, packed["emb_slab"], packed["w1"], packed["w2"], packed["vslab"])

    return out.reshape(-1)   # logits.view(-1)


# ----------------------------------------------------------------------------------
# Pure-JAX reference (same math, unpacked params) for verification
# ----------------------------------------------------------------------------------
def task2_forward_ref(params, input_ids, attention_mask, token_type_ids):
    maskf = attention_mask.astype(jnp.float32)
    emb = (params["word_emb"][input_ids]
           + params["pos_emb"][jnp.arange(S)][None, :, :]
           + params["type_emb"][token_type_ids]).astype(jnp.float32)

    def ln(v, g, b):
        mu = jnp.mean(v, -1, keepdims=True)
        var = jnp.mean((v - mu) ** 2, -1, keepdims=True)
        return (v - mu) / jnp.sqrt(var + LN_EPS) * g + b

    x = ln(emb, params["ln0_g"], params["ln0_b"])
    qkv = x @ params["w_qkv"] + params["b_qkv"]
    q, k, v = jnp.split(qkv, 3, axis=-1)

    def split_heads(t):
        return t.reshape(B, S, NUM_HEADS, DH).transpose(0, 2, 1, 3)

    qh, kh, vh = split_heads(q), split_heads(k), split_heads(v)
    s = jnp.einsum("bhqd,bhkd->bhqk", qh, kh) / math.sqrt(DH)
    s = s + ((1.0 - maskf) * -1e9)[:, None, None, :]
    p = jax.nn.softmax(s, axis=-1)
    ctx = jnp.einsum("bhqk,bhkd->bhqd", p, vh).transpose(0, 2, 1, 3).reshape(B, S, H)
    x = ln(x + ctx @ params["w_ao"] + params["b_ao"], params["ln1_g"], params["ln1_b"])
    hmid = _gelu(x @ params["w_in"] + params["b_in"])
    x = ln(x + hmid @ params["w_out"] + params["b_out"], params["ln2_g"], params["ln2_b"])

    m = maskf[:, :, None]
    pooled = (x * m).sum(1) / jnp.maximum(m.sum(1), 1e-9)
    logits = pooled @ params["w_cls"] + params["b_cls"]
    return logits.reshape(-1)


if __name__ == "__main__":
    key = jax.random.PRNGKey(0)
    kp, ki, kt = jax.random.split(key, 3)
    params = init_params(kp)
    packed = pack_params(params)

    input_ids = jax.random.randint(ki, (B, S), 0, VOCAB, dtype=jnp.int32)
    token_type_ids = jax.random.randint(kt, (B, S), 0, NUM_TYPES, dtype=jnp.int32)
    attention_mask = jnp.array([[1, 1, 1, 1, 1, 1, 1, 1],
                                [1, 1, 1, 1, 1, 0, 0, 0]], dtype=jnp.int32)

    logits = task2_forward(packed, input_ids, attention_mask, token_type_ids)
    jax.block_until_ready(logits)

    ref = task2_forward_ref(params, input_ids, attention_mask, token_type_ids)
    assert logits.shape == (B,), logits.shape
    np.testing.assert_allclose(np.asarray(logits), np.asarray(ref), rtol=1e-4, atol=1e-4)

    print("KERNEL_OK")
</pallas_src>

<mosaic_0001>
module attributes {stable_mosaic.version = 11 : i64} {
  func.func @fused_kernel(%arg0: memref<16x3xi32, #tpu.memory_space<vmem>>, %arg1: memref<16x1xf32, #tpu.memory_space<vmem>>, %arg2: memref<2x8xf32, #tpu.memory_space<vmem>>, %arg3: memref<60x32xf32, #tpu.memory_space<vmem>>, %arg4: memref<32x192xf32, #tpu.memory_space<vmem>>, %arg5: memref<64x32xf32, #tpu.memory_space<vmem>>, %arg6: memref<16x64xf32, #tpu.memory_space<vmem>>, %arg7: memref<2x1xf32, #tpu.memory_space<vmem>>, %arg8: memref<16x32xf32, #tpu.memory_space<vmem>>) attributes {dimension_semantics = [], scalar_prefetch = 0 : i64, scratch_operands = 1 : i64, tpu.core_type = #tpu.core_type<tc>} {
    %c0 = arith.constant 0 : index
    %c0_0 = arith.constant 0 : index
    %0 = vector.load %arg0[%c0, %c0_0] : memref<16x3xi32, #tpu.memory_space<vmem>>, vector<16x3xi32>
    %c0_1 = arith.constant 0 : index
    %c0_2 = arith.constant 0 : index
    %1 = vector.load %arg1[%c0_1, %c0_2] : memref<16x1xf32, #tpu.memory_space<vmem>>, vector<16x1xf32>
    %2 = tpu.iota {dimensions = array<i32: 1>} : vector<16x60xi32>
    %3 = vector.extract_strided_slice %0 {offsets = [0, 0], sizes = [16, 1], strides = [1, 1]} : vector<16x3xi32> to vector<16x1xi32>
    %4 = vector.broadcast %3 : vector<16x1xi32> to vector<16x60xi32>
    %5 = arith.cmpi eq, %2, %4 : vector<16x60xi32>
    %6 = arith.extui %5 : vector<16x60xi1> to vector<16x60xi32>
    %7 = arith.sitofp %6 : vector<16x60xi32> to vector<16x60xf32>
    %8 = vector.extract_strided_slice %0 {offsets = [0, 1], sizes = [16, 1], strides = [1, 1]} : vector<16x3xi32> to vector<16x1xi32>
    %9 = vector.broadcast %8 : vector<16x1xi32> to vector<16x60xi32>
    %10 = arith.cmpi eq, %2, %9 : vector<16x60xi32>
    %11 = arith.extui %10 : vector<16x60xi1> to vector<16x60xi32>
    %12 = arith.sitofp %11 : vector<16x60xi32> to vector<16x60xf32>
    %13 = arith.addf %7, %12 : vector<16x60xf32>
    %14 = vector.extract_strided_slice %0 {offsets = [0, 2], sizes = [16, 1], strides = [1, 1]} : vector<16x3xi32> to vector<16x1xi32>
    %15 = vector.broadcast %14 : vector<16x1xi32> to vector<16x60xi32>
    %16 = arith.cmpi eq, %2, %15 : vector<16x60xi32>
    %17 = arith.extui %16 : vector<16x60xi1> to vector<16x60xi32>
    %18 = arith.sitofp %17 : vector<16x60xi32> to vector<16x60xf32>
    %19 = arith.addf %13, %18 : vector<16x60xf32>
    %c0_3 = arith.constant 0 : index
    %c0_4 = arith.constant 0 : index
    %20 = vector.load %arg3[%c0_3, %c0_4] : memref<60x32xf32, #tpu.memory_space<vmem>>, vector<60x32xf32>
    %cst = arith.constant dense<0.000000e+00> : vector<16x32xf32>
    %21 = tpu.matmul %19, %20, %cst {dimension_numbers = #tpu.dot_dimension_numbers<[1], [0], [0], [1], [0, 0, 1, 1], [], []>} : vector<16x60xf32>, vector<60x32xf32>, vector<16x32xf32> -> vector<16x32xf32>
    %c0_5 = arith.constant 0 : index
    %c0_6 = arith.constant 0 : index
    %22 = vector.load %arg6[%c0_5, %c0_6] : memref<16x64xf32, #tpu.memory_space<vmem>>, vector<1x32xf32>
    %c1 = arith.constant 1 : index
    %c0_7 = arith.constant 0 : index
    %23 = vector.load %arg6[%c1, %c0_7] : memref<16x64xf32, #tpu.memory_space<vmem>>, vector<1x32xf32>
    %cst_8 = arith.constant dense<0.000000e+00> : vector<16xf32>
    %24 = vector.multi_reduction <add>, %21, %cst_8 [1] : vector<16x32xf32> to vector<16xf32>
    %25 = vector.shape_cast %24 : vector<16xf32> to vector<16x1xf32>
    %cst_9 = arith.constant 3.200000e+01 : f32
    %26 = vector.broadcast %cst_9 : f32 to vector<16x1xf32>
    %27 = arith.divf %25, %26 : vector<16x1xf32>
    %28 = vector.broadcast %27 : vector<16x1xf32> to vector<16x32xf32>
    %29 = arith.subf %21, %28 : vector<16x32xf32>
    %30 = arith.mulf %29, %29 : vector<16x32xf32>
    %cst_10 = arith.constant dense<0.000000e+00> : vector<16xf32>
    %31 = vector.multi_reduction <add>, %30, %cst_10 [1] : vector<16x32xf32> to vector<16xf32>
    %32 = vector.shape_cast %31 : vector<16xf32> to vector<16x1xf32>
    %cst_11 = arith.constant 3.200000e+01 : f32
    %33 = vector.broadcast %cst_11 : f32 to vector<16x1xf32>
    %34 = arith.divf %32, %33 : vector<16x1xf32>
    %35 = vector.broadcast %27 : vector<16x1xf32> to vector<16x32xf32>
    %36 = arith.subf %21, %35 : vector<16x32xf32>
    %cst_12 = arith.constant 9.99999996E-13 : f32
    %37 = vector.broadcast %cst_12 : f32 to vector<16x1xf32>
    %38 = arith.addf %34, %37 : vector<16x1xf32>
    %39 = math.rsqrt %38 : vector<16x1xf32>
    %40 = vector.broadcast %39 : vector<16x1xf32> to vector<16x32xf32>
    %41 = arith.mulf %36, %40 : vector<16x32xf32>
    %42 = vector.broadcast %22 : vector<1x32xf32> to vector<16x32xf32>
    %43 = arith.mulf %41, %42 : vector<16x32xf32>
    %44 = vector.broadcast %23 : vector<1x32xf32> to vector<16x32xf32>
    %45 = arith.addf %43, %44 : vector<16x32xf32>
    %c0_13 = arith.constant 0 : index
    %c0_14 = arith.constant 0 : index
    %46 = vector.load %arg4[%c0_13, %c0_14] : memref<32x192xf32, #tpu.memory_space<vmem>>, vector<32x32xf32>
    %cst_15 = arith.constant dense<0.000000e+00> : vector<16x32xf32>
    %47 = tpu.matmul %45, %46, %cst_15 {dimension_numbers = #tpu.dot_dimension_numbers<[1], [0], [0], [1], [0, 0, 1, 1], [], []>} : vector<16x32xf32>, vector<32x32xf32>, vector<16x32xf32> -> vector<16x32xf32>
    %c2 = arith.constant 2 : index
    %c0_16 = arith.constant 0 : index
    %48 = vector.load %arg6[%c2, %c0_16] : memref<16x64xf32, #tpu.memory_space<vmem>>, vector<1x32xf32>
    %49 = vector.broadcast %48 : vector<1x32xf32> to vector<16x32xf32>
    %50 = arith.addf %47, %49 : vector<16x32xf32>
    %c0_17 = arith.constant 0 : index
    %c32 = arith.constant 32 : index
    %51 = vector.load %arg4[%c0_17, %c32] : memref<32x192xf32, #tpu.memory_space<vmem>>, vector<32x32xf32>
    %cst_18 = arith.constant dense<0.000000e+00> : vector<16x32xf32>
    %52 = tpu.matmul %45, %51, %cst_18 {dimension_numbers = #tpu.dot_dimension_numbers<[1], [0], [0], [1], [0, 0, 1, 1], [], []>} : vector<16x32xf32>, vector<32x32xf32>, vector<16x32xf32> -> vector<16x32xf32>
    %c3 = arith.constant 3 : index
    %c0_19 = arith.constant 0 : index
    %53 = vector.load %arg6[%c3, %c0_19] : memref<16x64xf32, #tpu.memory_space<vmem>>, vector<1x32xf32>
    %54 = vector.broadcast %53 : vector<1x32xf32> to vector<16x32xf32>
    %55 = arith.addf %52, %54 : vector<16x32xf32>
    %c0_20 = arith.constant 0 : index
    %c64 = arith.constant 64 : index
    %56 = vector.load %arg4[%c0_20, %c64] : memref<32x192xf32, #tpu.memory_space<vmem>>, vector<32x32xf32>
    %cst_21 = arith.constant dense<0.000000e+00> : vector<16x32xf32>
    %57 = tpu.matmul %45, %56, %cst_21 {dimension_numbers = #tpu.dot_dimension_numbers<[1], [0], [0], [1], [0, 0, 1, 1], [], []>} : vector<16x32xf32>, vector<32x32xf32>, vector<16x32xf32> -> vector<16x32xf32>
    %c4 = arith.constant 4 : index
    %c0_22 = arith.constant 0 : index
    %58 = vector.load %arg6[%c4, %c0_22] : memref<16x64xf32, #tpu.memory_space<vmem>>, vector<1x32xf32>
    %59 = vector.broadcast %58 : vector<1x32xf32> to vector<16x32xf32>
    %60 = arith.addf %57, %59 : vector<16x32xf32>
    %c0_23 = arith.constant 0 : index
    %c0_24 = arith.constant 0 : index
    %61 = vector.load %arg2[%c0_23, %c0_24] : memref<2x8xf32, #tpu.memory_space<vmem>>, vector<1x8xf32>
    %cst_25 = arith.constant 1.000000e+00 : f32
    %62 = vector.broadcast %cst_25 : f32 to vector<1x8xf32>
    %63 = arith.subf %62, %61 : vector<1x8xf32>
    %cst_26 = arith.constant -1.000000e+09 : f32
    %64 = vector.broadcast %cst_26 : f32 to vector<1x8xf32>
    %65 = arith.mulf %63, %64 : vector<1x8xf32>
    %66 = vector.extract_strided_slice %50 {offsets = [0, 0], sizes = [8, 16], strides = [1, 1]} : vector<16x32xf32> to vector<8x16xf32>
    %67 = vector.extract_strided_slice %55 {offsets = [0, 0], sizes = [8, 16], strides = [1, 1]} : vector<16x32xf32> to vector<8x16xf32>
    %68 = vector.extract_strided_slice %60 {offsets = [0, 0], sizes = [8, 16], strides = [1, 1]} : vector<16x32xf32> to vector<8x16xf32>
    %cst_27 = arith.constant dense<0.000000e+00> : vector<8x8xf32>
    %69 = tpu.matmul %66, %67, %cst_27 {dimension_numbers = #tpu.dot_dimension_numbers<[1], [1], [0], [0], [0, 0, 1, 0], [], []>} : vector<8x16xf32>, vector<8x16xf32>, vector<8x8xf32> -> vector<8x8xf32>
    %70 = vector.broadcast %65 : vector<1x8xf32> to vector<8x8xf32>
    %71 = arith.addf %69, %70 : vector<8x8xf32>
    %cst_28 = arith.constant dense<0xFF800000> : vector<8xf32>
    %72 = vector.multi_reduction <maximumf>, %71, %cst_28 [1] : vector<8x8xf32> to vector<8xf32>
    %73 = vector.shape_cast %72 : vector<8xf32> to vector<8x1xf32>
    %74 = vector.broadcast %73 : vector<8x1xf32> to vector<8x8xf32>
    %75 = arith.subf %71, %74 : vector<8x8xf32>
    %76 = math.exp %75 : vector<8x8xf32>
    %cst_29 = arith.constant dense<0.000000e+00> : vector<8xf32>
    %77 = vector.multi_reduction <add>, %76, %cst_29 [1] : vector<8x8xf32> to vector<8xf32>
    %78 = vector.shape_cast %77 : vector<8xf32> to vector<8x1xf32>
    %79 = vector.broadcast %78 : vector<8x1xf32> to vector<8x8xf32>
    %80 = arith.divf %76, %79 : vector<8x8xf32>
    %cst_30 = arith.constant dense<0.000000e+00> : vector<8x16xf32>
    %81 = tpu.matmul %80, %68, %cst_30 {dimension_numbers = #tpu.dot_dimension_numbers<[1], [0], [0], [1], [0, 0, 1, 1], [], []>} : vector<8x8xf32>, vector<8x16xf32>, vector<8x16xf32> -> vector<8x16xf32>
    %c0_31 = arith.constant 0 : index
    %c0_32 = arith.constant 0 : index
    %82 = vector.load %arg8[%c0_31, %c0_32] : memref<16x32xf32, #tpu.memory_space<vmem>>, vector<8x16xf32>
    tpu.vector_store %arg8[%c0_31, %c0_32], %81 {strides = array<i32>} : memref<16x32xf32, #tpu.memory_space<vmem>>, vector<8x16xf32>,
    %83 = vector.extract_strided_slice %50 {offsets = [0, 16], sizes = [8, 16], strides = [1, 1]} : vector<16x32xf32> to vector<8x16xf32>
    %84 = vector.extract_strided_slice %55 {offsets = [0, 16], sizes = [8, 16], strides = [1, 1]} : vector<16x32xf32> to vector<8x16xf32>
    %85 = vector.extract_strided_slice %60 {offsets = [0, 16], sizes = [8, 16], strides = [1, 1]} : vector<16x32xf32> to vector<8x16xf32>
    %cst_33 = arith.constant dense<0.000000e+00> : vector<8x8xf32>
    %86 = tpu.matmul %83, %84, %cst_33 {dimension_numbers = #tpu.dot_dimension_numbers<[1], [1], [0], [0], [0, 0, 1, 0], [], []>} : vector<8x16xf32>, vector<8x16xf32>, vector<8x8xf32> -> vector<8x8xf32>
    %87 = vector.broadcast %65 : vector<1x8xf32> to vector<8x8xf32>
    %88 = arith.addf %86, %87 : vector<8x8xf32>
    %cst_34 = arith.constant dense<0xFF800000> : vector<8xf32>
    %89 = vector.multi_reduction <maximumf>, %88, %cst_34 [1] : vector<8x8xf32> to vector<8xf32>
    %90 = vector.shape_cast %89 : vector<8xf32> to vector<8x1xf32>
    %91 = vector.broadcast %90 : vector<8x1xf32> to vector<8x8xf32>
    %92 = arith.subf %88, %91 : vector<8x8xf32>
    %93 = math.exp %92 : vector<8x8xf32>
    %cst_35 = arith.constant dense<0.000000e+00> : vector<8xf32>
    %94 = vector.multi_reduction <add>, %93, %cst_35 [1] : vector<8x8xf32> to vector<8xf32>
    %95 = vector.shape_cast %94 : vector<8xf32> to vector<8x1xf32>
    %96 = vector.broadcast %95 : vector<8x1xf32> to vector<8x8xf32>
    %97 = arith.divf %93, %96 : vector<8x8xf32>
    %cst_36 = arith.constant dense<0.000000e+00> : vector<8x16xf32>
    %98 = tpu.matmul %97, %85, %cst_36 {dimension_numbers = #tpu.dot_dimension_numbers<[1], [0], [0], [1], [0, 0, 1, 1], [], []>} : vector<8x8xf32>, vector<8x16xf32>, vector<8x16xf32> -> vector<8x16xf32>
    %c0_37 = arith.constant 0 : index
    %c16 = arith.constant 16 : index
    %99 = vector.load %arg8[%c0_37, %c16] : memref<16x32xf32, #tpu.memory_space<vmem>>, vector<8x16xf32>
    tpu.vector_store %arg8[%c0_37, %c16], %98 {strides = array<i32>} : memref<16x32xf32, #tpu.memory_space<vmem>>, vector<8x16xf32>,
    %c1_38 = arith.constant 1 : index
    %c0_39 = arith.constant 0 : index
    %100 = vector.load %arg2[%c1_38, %c0_39] : memref<2x8xf32, #tpu.memory_space<vmem>>, vector<1x8xf32>
    %cst_40 = arith.constant 1.000000e+00 : f32
    %101 = vector.broadcast %cst_40 : f32 to vector<1x8xf32>
    %102 = arith.subf %101, %100 : vector<1x8xf32>
    %cst_41 = arith.constant -1.000000e+09 : f32
    %103 = vector.broadcast %cst_41 : f32 to vector<1x8xf32>
    %104 = arith.mulf %102, %103 : vector<1x8xf32>
    %105 = vector.extract_strided_slice %50 {offsets = [8, 0], sizes = [8, 16], strides = [1, 1]} : vector<16x32xf32> to vector<8x16xf32>
    %106 = vector.extract_strided_slice %55 {offsets = [8, 0], sizes = [8, 16], strides = [1, 1]} : vector<16x32xf32> to vector<8x16xf32>
    %107 = vector.extract_strided_slice %60 {offsets = [8, 0], sizes = [8, 16], strides = [1, 1]} : vector<16x32xf32> to vector<8x16xf32>
    %cst_42 = arith.constant dense<0.000000e+00> : vector<8x8xf32>
    %108 = tpu.matmul %105, %106, %cst_42 {dimension_numbers = #tpu.dot_dimension_numbers<[1], [1], [0], [0], [0, 0, 1, 0], [], []>} : vector<8x16xf32>, vector<8x16xf32>, vector<8x8xf32> -> vector<8x8xf32>
    %109 = vector.broadcast %104 : vector<1x8xf32> to vector<8x8xf32>
    %110 = arith.addf %108, %109 : vector<8x8xf32>
    %cst_43 = arith.constant dense<0xFF800000> : vector<8xf32>
    %111 = vector.multi_reduction <maximumf>, %110, %cst_43 [1] : vector<8x8xf32> to vector<8xf32>
    %112 = vector.shape_cast %111 : vector<8xf32> to vector<8x1xf32>
    %113 = vector.broadcast %112 : vector<8x1xf32> to vector<8x8xf32>
    %114 = arith.subf %110, %113 : vector<8x8xf32>
    %115 = math.exp %114 : vector<8x8xf32>
    %cst_44 = arith.constant dense<0.000000e+00> : vector<8xf32>
    %116 = vector.multi_reduction <add>, %115, %cst_44 [1] : vector<8x8xf32> to vector<8xf32>
    %117 = vector.shape_cast %116 : vector<8xf32> to vector<8x1xf32>
    %118 = vector.broadcast %117 : vector<8x1xf32> to vector<8x8xf32>
    %119 = arith.divf %115, %118 : vector<8x8xf32>
    %cst_45 = arith.constant dense<0.000000e+00> : vector<8x16xf32>
    %120 = tpu.matmul %119, %107, %cst_45 {dimension_numbers = #tpu.dot_dimension_numbers<[1], [0], [0], [1], [0, 0, 1, 1], [], []>} : vector<8x8xf32>, vector<8x16xf32>, vector<8x16xf32> -> vector<8x16xf32>
    %c8 = arith.constant 8 : index
    %c0_46 = arith.constant 0 : index
    %121 = vector.load %arg8[%c8, %c0_46] : memref<16x32xf32, #tpu.memory_space<vmem>>, vector<8x16xf32>
    tpu.vector_store %arg8[%c8, %c0_46], %120 {strides = array<i32>} : memref<16x32xf32, #tpu.memory_space<vmem>>, vector<8x16xf32>,
    %122 = vector.extract_strided_slice %50 {offsets = [8, 16], sizes = [8, 16], strides = [1, 1]} : vector<16x32xf32> to vector<8x16xf32>
    %123 = vector.extract_strided_slice %55 {offsets = [8, 16], sizes = [8, 16], strides = [1, 1]} : vector<16x32xf32> to vector<8x16xf32>
    %124 = vector.extract_strided_slice %60 {offsets = [8, 16], sizes = [8, 16], strides = [1, 1]} : vector<16x32xf32> to vector<8x16xf32>
    %cst_47 = arith.constant dense<0.000000e+00> : vector<8x8xf32>
    %125 = tpu.matmul %122, %123, %cst_47 {dimension_numbers = #tpu.dot_dimension_numbers<[1], [1], [0], [0], [0, 0, 1, 0], [], []>} : vector<8x16xf32>, vector<8x16xf32>, vector<8x8xf32> -> vector<8x8xf32>
    %126 = vector.broadcast %104 : vector<1x8xf32> to vector<8x8xf32>
    %127 = arith.addf %125, %126 : vector<8x8xf32>
    %cst_48 = arith.constant dense<0xFF800000> : vector<8xf32>
    %128 = vector.multi_reduction <maximumf>, %127, %cst_48 [1] : vector<8x8xf32> to vector<8xf32>
    %129 = vector.shape_cast %128 : vector<8xf32> to vector<8x1xf32>
    %130 = vector.broadcast %129 : vector<8x1xf32> to vector<8x8xf32>
    %131 = arith.subf %127, %130 : vector<8x8xf32>
    %132 = math.exp %131 : vector<8x8xf32>
    %cst_49 = arith.constant dense<0.000000e+00> : vector<8xf32>
    %133 = vector.multi_reduction <add>, %132, %cst_49 [1] : vector<8x8xf32> to vector<8xf32>
    %134 = vector.shape_cast %133 : vector<8xf32> to vector<8x1xf32>
    %135 = vector.broadcast %134 : vector<8x1xf32> to vector<8x8xf32>
    %136 = arith.divf %132, %135 : vector<8x8xf32>
    %cst_50 = arith.constant dense<0.000000e+00> : vector<8x16xf32>
    %137 = tpu.matmul %136, %124, %cst_50 {dimension_numbers = #tpu.dot_dimension_numbers<[1], [0], [0], [1], [0, 0, 1, 1], [], []>} : vector<8x8xf32>, vector<8x16xf32>, vector<8x16xf32> -> vector<8x16xf32>
    %c8_51 = arith.constant 8 : index
    %c16_52 = arith.constant 16 : index
    %138 = vector.load %arg8[%c8_51, %c16_52] : memref<16x32xf32, #tpu.memory_space<vmem>>, vector<8x16xf32>
    tpu.vector_store %arg8[%c8_51, %c16_52], %137 {strides = array<i32>} : memref<16x32xf32, #tpu.memory_space<vmem>>, vector<8x16xf32>,
    %c0_53 = arith.constant 0 : index
    %c0_54 = arith.constant 0 : index
    %139 = vector.load %arg8[%c0_53, %c0_54] : memref<16x32xf32, #tpu.memory_space<vmem>>, vector<16x32xf32>
    %c0_55 = arith.constant 0 : index
    %c96 = arith.constant 96 : index
    %140 = vector.load %arg4[%c0_55, %c96] : memref<32x192xf32, #tpu.memory_space<vmem>>, vector<32x32xf32>
    %cst_56 = arith.constant dense<0.000000e+00> : vector<16x32xf32>
    %141 = tpu.matmul %139, %140, %cst_56 {dimension_numbers = #tpu.dot_dimension_numbers<[1], [0], [0], [1], [0, 0, 1, 1], [], []>} : vector<16x32xf32>, vector<32x32xf32>, vector<16x32xf32> -> vector<16x32xf32>
    %c5 = arith.constant 5 : index
    %c0_57 = arith.constant 0 : index
    %142 = vector.load %arg6[%c5, %c0_57] : memref<16x64xf32, #tpu.memory_space<vmem>>, vector<1x32xf32>
    %143 = vector.broadcast %142 : vector<1x32xf32> to vector<16x32xf32>
    %144 = arith.addf %141, %143 : vector<16x32xf32>
    %145 = arith.addf %45, %144 : vector<16x32xf32>
    %c6 = arith.constant 6 : index
    %c0_58 = arith.constant 0 : index
    %146 = vector.load %arg6[%c6, %c0_58] : memref<16x64xf32, #tpu.memory_space<vmem>>, vector<1x32xf32>
    %c7 = arith.constant 7 : index
    %c0_59 = arith.constant 0 : index
    %147 = vector.load %arg6[%c7, %c0_59] : memref<16x64xf32, #tpu.memory_space<vmem>>, vector<1x32xf32>
    %cst_60 = arith.constant dense<0.000000e+00> : vector<16xf32>
    %148 = vector.multi_reduction <add>, %145, %cst_60 [1] : vector<16x32xf32> to vector<16xf32>
    %149 = vector.shape_cast %148 : vector<16xf32> to vector<16x1xf32>
    %cst_61 = arith.constant 3.200000e+01 : f32
    %150 = vector.broadcast %cst_61 : f32 to vector<16x1xf32>
    %151 = arith.divf %149, %150 : vector<16x1xf32>
    %152 = vector.broadcast %151 : vector<16x1xf32> to vector<16x32xf32>
    %153 = arith.subf %145, %152 : vector<16x32xf32>
    %154 = arith.mulf %153, %153 : vector<16x32xf32>
    %cst_62 = arith.constant dense<0.000000e+00> : vector<16xf32>
    %155 = vector.multi_reduction <add>, %154, %cst_62 [1] : vector<16x32xf32> to vector<16xf32>
    %156 = vector.shape_cast %155 : vector<16xf32> to vector<16x1xf32>
    %cst_63 = arith.constant 3.200000e+01 : f32
    %157 = vector.broadcast %cst_63 : f32 to vector<16x1xf32>
    %158 = arith.divf %156, %157 : vector<16x1xf32>
    %159 = vector.broadcast %151 : vector<16x1xf32> to vector<16x32xf32>
    %160 = arith.subf %145, %159 : vector<16x32xf32>
    %cst_64 = arith.constant 9.99999996E-13 : f32
    %161 = vector.broadcast %cst_64 : f32 to vector<16x1xf32>
    %162 = arith.addf %158, %161 : vector<16x1xf32>
    %163 = math.rsqrt %162 : vector<16x1xf32>
    %164 = vector.broadcast %163 : vector<16x1xf32> to vector<16x32xf32>
    %165 = arith.mulf %160, %164 : vector<16x32xf32>
    %166 = vector.broadcast %146 : vector<1x32xf32> to vector<16x32xf32>
    %167 = arith.mulf %165, %166 : vector<16x32xf32>
    %168 = vector.broadcast %147 : vector<1x32xf32> to vector<16x32xf32>
    %169 = arith.addf %167, %168 : vector<16x32xf32>
    %c0_65 = arith.constant 0 : index
    %c128 = arith.constant 128 : index
    %170 = vector.load %arg4[%c0_65, %c128] : memref<32x192xf32, #tpu.memory_space<vmem>>, vector<32x64xf32>
    %cst_66 = arith.constant dense<0.000000e+00> : vector<16x64xf32>
    %171 = tpu.matmul %169, %170, %cst_66 {dimension_numbers = #tpu.dot_dimension_numbers<[1], [0], [0], [1], [0, 0, 1, 1], [], []>} : vector<16x32xf32>, vector<32x64xf32>, vector<16x64xf32> -> vector<16x64xf32>
    %c8_67 = arith.constant 8 : index
    %c0_68 = arith.constant 0 : index
    %172 = vector.load %arg6[%c8_67, %c0_68] : memref<16x64xf32, #tpu.memory_space<vmem>>, vector<1x64xf32>
    %173 = vector.broadcast %172 : vector<1x64xf32> to vector<16x64xf32>
    %174 = arith.addf %171, %173 : vector<16x64xf32>
    %cst_69 = arith.constant 5.000000e-01 : f32
    %175 = vector.broadcast %cst_69 : f32 to vector<16x64xf32>
    %176 = arith.mulf %175, %174 : vector<16x64xf32>
    %cst_70 = arith.constant 4.471500e-02 : f32
    %177 = vector.broadcast %cst_70 : f32 to vector<16x64xf32>
    %178 = arith.mulf %177, %174 : vector<16x64xf32>
    %179 = arith.mulf %178, %174 : vector<16x64xf32>
    %180 = arith.mulf %179, %174 : vector<16x64xf32>
    %181 = arith.addf %174, %180 : vector<16x64xf32>
    %cst_71 = arith.constant 0.797884583 : f32
    %182 = vector.broadcast %cst_71 : f32 to vector<16x64xf32>
    %183 = arith.mulf %182, %181 : vector<16x64xf32>
    %184 = math.tanh %183 : vector<16x64xf32>
    %cst_72 = arith.constant 1.000000e+00 : f32
    %185 = vector.broadcast %cst_72 : f32 to vector<16x64xf32>
    %186 = arith.addf %185, %184 : vector<16x64xf32>
    %187 = arith.mulf %176, %186 : vector<16x64xf32>
    %c0_73 = arith.constant 0 : index
    %c0_74 = arith.constant 0 : index
    %188 = vector.load %arg5[%c0_73, %c0_74] : memref<64x32xf32, #tpu.memory_space<vmem>>, vector<64x32xf32>
    %cst_75 = arith.constant dense<0.000000e+00> : vector<16x32xf32>
    %189 = tpu.matmul %187, %188, %cst_75 {dimension_numbers = #tpu.dot_dimension_numbers<[1], [0], [0], [1], [0, 0, 1, 1], [], []>} : vector<16x64xf32>, vector<64x32xf32>, vector<16x32xf32> -> vector<16x32xf32>
    %c9 = arith.constant 9 : index
    %c0_76 = arith.constant 0 : index
    %190 = vector.load %arg6[%c9, %c0_76] : memref<16x64xf32, #tpu.memory_space<vmem>>, vector<1x32xf32>
    %191 = vector.broadcast %190 : vector<1x32xf32> to vector<16x32xf32>
    %192 = arith.addf %189, %191 : vector<16x32xf32>
    %193 = arith.addf %169, %192 : vector<16x32xf32>
    %c10 = arith.constant 10 : index
    %c0_77 = arith.constant 0 : index
    %194 = vector.load %arg6[%c10, %c0_77] : memref<16x64xf32, #tpu.memory_space<vmem>>, vector<1x32xf32>
    %c11 = arith.constant 11 : index
    %c0_78 = arith.constant 0 : index
    %195 = vector.load %arg6[%c11, %c0_78] : memref<16x64xf32, #tpu.memory_space<vmem>>, vector<1x32xf32>
    %cst_79 = arith.constant dense<0.000000e+00> : vector<16xf32>
    %196 = vector.multi_reduction <add>, %193, %cst_79 [1] : vector<16x32xf32> to vector<16xf32>
    %197 = vector.shape_cast %196 : vector<16xf32> to vector<16x1xf32>
    %cst_80 = arith.constant 3.200000e+01 : f32
    %198 = vector.broadcast %cst_80 : f32 to vector<16x1xf32>
    %199 = arith.divf %197, %198 : vector<16x1xf32>
    %200 = vector.broadcast %199 : vector<16x1xf32> to vector<16x32xf32>
    %201 = arith.subf %193, %200 : vector<16x32xf32>
    %202 = arith.mulf %201, %201 : vector<16x32xf32>
    %cst_81 = arith.constant dense<0.000000e+00> : vector<16xf32>
    %203 = vector.multi_reduction <add>, %202, %cst_81 [1] : vector<16x32xf32> to vector<16xf32>
    %204 = vector.shape_cast %203 : vector<16xf32> to vector<16x1xf32>
    %cst_82 = arith.constant 3.200000e+01 : f32
    %205 = vector.broadcast %cst_82 : f32 to vector<16x1xf32>
    %206 = arith.divf %204, %205 : vector<16x1xf32>
    %207 = vector.broadcast %199 : vector<16x1xf32> to vector<16x32xf32>
    %208 = arith.subf %193, %207 : vector<16x32xf32>
    %cst_83 = arith.constant 9.99999996E-13 : f32
    %209 = vector.broadcast %cst_83 : f32 to vector<16x1xf32>
    %210 = arith.addf %206, %209 : vector<16x1xf32>
    %211 = math.rsqrt %210 : vector<16x1xf32>
    %212 = vector.broadcast %211 : vector<16x1xf32> to vector<16x32xf32>
    %213 = arith.mulf %208, %212 : vector<16x32xf32>
    %214 = vector.broadcast %194 : vector<1x32xf32> to vector<16x32xf32>
    %215 = arith.mulf %213, %214 : vector<16x32xf32>
    %216 = vector.broadcast %195 : vector<1x32xf32> to vector<16x32xf32>
    %217 = arith.addf %215, %216 : vector<16x32xf32>
    %218 = tpu.iota {dimensions = array<i32: 0>} : vector<2x16xi32>
    %c8_i32 = arith.constant 8 : i32
    %219 = vector.broadcast %c8_i32 : i32 to vector<2x16xi32>
    %220 = arith.muli %218, %219 : vector<2x16xi32>
    %221 = tpu.iota {dimensions = array<i32: 1>} : vector<2x16xi32>
    %222 = arith.cmpi sge, %221, %220 : vector<2x16xi32>
    %c8_i32_84 = arith.constant 8 : i32
    %223 = vector.broadcast %c8_i32_84 : i32 to vector<2x16xi32>
    %224 = arith.addi %220, %223 : vector<2x16xi32>
    %225 = arith.cmpi slt, %221, %224 : vector<2x16xi32>
    %226 = arith.andi %222, %225 : vector<2x16xi1>
    %227 = arith.extui %226 : vector<2x16xi1> to vector<2x16xi32>
    %228 = arith.sitofp %227 : vector<2x16xi32> to vector<2x16xf32>
    %229 = vector.broadcast %1 : vector<16x1xf32> to vector<16x32xf32>
    %230 = arith.mulf %217, %229 : vector<16x32xf32>
    %cst_85 = arith.constant dense<0.000000e+00> : vector<2x32xf32>
    %231 = tpu.matmul %228, %230, %cst_85 {dimension_numbers = #tpu.dot_dimension_numbers<[1], [0], [0], [1], [0, 0, 1, 1], [], []>} : vector<2x16xf32>, vector<16x32xf32>, vector<2x32xf32> -> vector<2x32xf32>
    %cst_86 = arith.constant dense<0.000000e+00> : vector<2x1xf32>
    %232 = tpu.matmul %228, %1, %cst_86 {dimension_numbers = #tpu.dot_dimension_numbers<[1], [0], [0], [1], [0, 0, 1, 1], [], []>} : vector<2x16xf32>, vector<16x1xf32>, vector<2x1xf32> -> vector<2x1xf32>
    %cst_87 = arith.constant 9.99999971E-10 : f32
    %233 = vector.broadcast %cst_87 : f32 to vector<2x1xf32>
    %234 = arith.maximumf %232, %233 : vector<2x1xf32>
    %235 = vector.broadcast %234 : vector<2x1xf32> to vector<2x32xf32>
    %236 = arith.divf %231, %235 : vector<2x32xf32>
    %c12 = arith.constant 12 : index
    %c0_88 = arith.constant 0 : index
    %237 = vector.load %arg6[%c12, %c0_88] : memref<16x64xf32, #tpu.memory_space<vmem>>, vector<1x32xf32>
    %238 = vector.broadcast %237 : vector<1x32xf32> to vector<2x32xf32>
    %239 = arith.mulf %236, %238 : vector<2x32xf32>
    %cst_89 = arith.constant dense<0.000000e+00> : vector<2xf32>
    %240 = vector.multi_reduction <add>, %239, %cst_89 [1] : vector<2x32xf32> to vector<2xf32>
    %241 = vector.shape_cast %240 : vector<2xf32> to vector<2x1xf32>
    %c13 = arith.constant 13 : index
    %c0_90 = arith.constant 0 : index
    %242 = vector.load %arg6[%c13, %c0_90] : memref<16x64xf32, #tpu.memory_space<vmem>>, vector<1x1xf32>
    %243 = vector.broadcast %242 : vector<1x1xf32> to vector<2x1xf32>
    %244 = arith.addf %241, %243 : vector<2x1xf32>
    %c0_91 = arith.constant 0 : index
    %c0_92 = arith.constant 0 : index
    %245 = vector.load %arg7[%c0_91, %c0_92] : memref<2x1xf32, #tpu.memory_space<vmem>>, vector<2x1xf32>
    tpu.vector_store %arg7[%c0_91, %c0_92], %244 {strides = array<i32>} : memref<2x1xf32, #tpu.memory_space<vmem>>, vector<2x1xf32>,
    return
  }
}

</mosaic_0001>

<llo_original>
// kernel: tpu_custom_call.1
$region0: #{tpu_custom_call.1}
  #allocation0 [shape = 'u32[]', space=smem, size = 0x4, offset = 0x4, fixed_abs, tag = 'smem constant byte address 0x4 - core index']
  #allocation1 [shape = 'u32[72,128]{1,0:T(1,128)}', space=vmem, size = 0x9000, scoped, tag = 'internal scratch']
  #allocation2 [shape = 'f32[16,32]{1,0:T(8,128)}', space=vmem, size = 0x2000, scoped, tag = 'scratch operand']
  %s0 = inlined_call_operand.vmem [shape: s32[16,3], index: 0, kind: input, shape index: {}]
  %s1 = inlined_call_operand.vmem [shape: f32[16,1], index: 1, kind: input, shape index: {}]
  %s2 = inlined_call_operand.vmem [shape: f32[2,8], index: 2, kind: input, shape index: {}]
  %s3 = inlined_call_operand.vmem [shape: f32[60,32], index: 3, kind: input, shape index: {}]
  %s4 = inlined_call_operand.vmem [shape: f32[32,192], index: 4, kind: input, shape index: {}]
  %s5 = inlined_call_operand.vmem [shape: f32[64,32], index: 5, kind: input, shape index: {}]
  %s6 = inlined_call_operand.vmem [shape: f32[16,64], index: 6, kind: input, shape index: {}]
  %s7 = inlined_call_operand.vmem [shape: f32[2,1], index: 7, kind: output, shape index: {}]
  %s8 = sld [smem:[#allocation0]]
  $region38: #{tpu_custom_call.1} parent=0
    _
  %s10 = ssub.s32 1, %s8
  %s11 = scalar_select 0, %s10, %s8
  // Predicated region
  $region2: #{tpu_custom_call.1} parent=0 // pred_check
    _
  $region3: #{tpu_custom_call.1} parent=0 // pred_check_branch
    %13 = sbr.rel (0) target = $region5
  $region4: #{tpu_custom_call.1} parent=0 // pred_region
    _
  $region5: #{tpu_custom_call.1} parent=0 // pred_fallthru
    _
  // Predicated region
  $region6: #{tpu_custom_call.1} parent=0 // pred_check
    _
  $region7: #{tpu_custom_call.1} parent=0 // pred_check_branch
    %15 = sbr.rel (0) target = $region9
  $region8: #{tpu_custom_call.1} parent=0 // pred_region
    _
  $region9: #{tpu_custom_call.1} parent=0 // pred_fallthru
    _
  // Predicated region
  $region10: #{tpu_custom_call.1} parent=0 // pred_check
    _
  $region11: #{tpu_custom_call.1} parent=0 // pred_check_branch
    %17 = sbr.rel (0) target = $region13
  $region12: #{tpu_custom_call.1} parent=0 // pred_region
    _
  $region13: #{tpu_custom_call.1} parent=0 // pred_fallthru
    _
  // Predicated region
  $region14: #{tpu_custom_call.1} parent=0 // pred_check
    _
  $region15: #{tpu_custom_call.1} parent=0 // pred_check_branch
    %19 = sbr.rel (0) target = $region17
  $region16: #{tpu_custom_call.1} parent=0 // pred_region
    _
  $region17: #{tpu_custom_call.1} parent=0 // pred_fallthru
    _
  // Predicated region
  $region18: #{tpu_custom_call.1} parent=0 // pred_check
    _
  $region19: #{tpu_custom_call.1} parent=0 // pred_check_branch
    %21 = sbr.rel (0) target = $region21
  $region20: #{tpu_custom_call.1} parent=0 // pred_region
    _
  $region21: #{tpu_custom_call.1} parent=0 // pred_fallthru
    _
  // Predicated region
  $region22: #{tpu_custom_call.1} parent=0 // pred_check
    _
  $region23: #{tpu_custom_call.1} parent=0 // pred_check_branch
    %23 = sbr.rel (0) target = $region25
  $region24: #{tpu_custom_call.1} parent=0 // pred_region
    _
  $region25: #{tpu_custom_call.1} parent=0 // pred_fallthru
    _
  // Predicated region
  $region26: #{tpu_custom_call.1} parent=0 // pred_check
    _
  $region27: #{tpu_custom_call.1} parent=0 // pred_check_branch
    %25 = sbr.rel (0) target = $region29
  $region28: #{tpu_custom_call.1} parent=0 // pred_region
    _
  $region29: #{tpu_custom_call.1} parent=0 // pred_fallthru
    _
  %v26 = vld [vmem:[%s0] sm:$0xff]
  %v27 = vld [vmem:[%s0 + $0x8] sm:$0xff]
  %v28 = vld [vmem:[%s1] sm:$0xff]
  %v29 = vld [vmem:[%s1 + $0x8] sm:$0xff]
  %v30 = vlaneseq
  %v31 = vand.u32 %v30, 127
  %32 = vset.pattern.permute.xlu0 0
  %33 = vperm.xlu0 %32, %v26
  %v34 = vpop.permute.xlu0 %33
  %35 = vset.pattern.permute.xlu0 0
  %36 = vperm.xlu0 %35, %v27
  %v37 = vpop.permute.xlu0 %36
  %vm38 = vcmp.eq.s32.totalorder %v31, %v34
  %vm39 = vcmp.eq.s32.totalorder %v31, %v37
  %v40 = vsel %vm38, 1, 0
  %v41 = vsel %vm39, 1, 0
  %v42 = vcvt.s32.f32 %v40
  %v43 = vcvt.s32.f32 %v41
  %44 = vset.pattern.permute.xlu0 1
  %45 = vperm.xlu0 %44, %v26
  %v46 = vpop.permute.xlu0 %45
  %47 = vset.pattern.permute.xlu0 1
  %48 = vperm.xlu0 %47, %v27
  %v49 = vpop.permute.xlu0 %48
  %vm50 = vcmp.eq.s32.totalorder %v31, %v46
  %vm51 = vcmp.eq.s32.totalorder %v31, %v49
  %v52 = vsel %vm50, 1, 0
  %v53 = vsel %vm51, 1, 0
  %v54 = vcvt.s32.f32 %v52
  %v55 = vcvt.s32.f32 %v53
  %v56 = vadd.f32 %v42, %v54
  %v57 = vadd.f32 %v43, %v55
  %58 = vset.pattern.permute.xlu0 2
  %59 = vperm.xlu0 %58, %v26
  %v60 = vpop.permute.xlu0 %59
  %61 = vset.pattern.permute.xlu0 2
  %62 = vperm.xlu0 %61, %v27
  %v63 = vpop.permute.xlu0 %62
  %vm64 = vcmp.eq.s32.totalorder %v31, %v60
  %vm65 = vcmp.eq.s32.totalorder %v31, %v63
  %v66 = vsel %vm64, 1, 0
  %v67 = vsel %vm65, 1, 0
  %v68 = vcvt.s32.f32 %v66
  %v69 = vcvt.s32.f32 %v67
  %v70 = vadd.f32 %v56, %v68
  %v71 = vadd.f32 %v57, %v69
  %v72 = vld [vmem:[%s3] sm:$0xff]
  %v73 = vld [vmem:[%s3 + $0x8] sm:$0xff]
  %v74 = vld [vmem:[%s3 + $0x10] sm:$0xff]
  %v75 = vld [vmem:[%s3 + $0x18] sm:$0xff]
  %v76 = vld [vmem:[%s3 + $0x20] sm:$0xff]
  %v77 = vld [vmem:[%s3 + $0x28] sm:$0xff]
  %v78 = vld [vmem:[%s3 + $0x30] sm:$0xff]
  %v79 = vld [vmem:[%s3 + $0x38] sm:$0xf]
  %vm80 = vcmask 490496
  %v82 = vsel %vm80, %v70, 0
  %v85 = vsel %vm80, %v71, 0
  %vm87 = vcmask 1043456
  %v89 = vsel %vm87, %v79, 0
  %91 = vmatpush.msra.mxu0 0.0
  %92 = vmatpush.msra.mxu0 0.0
  %93 = vmatpush.msra.mxu0 0.0
  %94 = vmatpush.msra.mxu0 0.0
  %95 = vmatpush.msra.mxu0 0.0
  %96 = vmatpush.msra.mxu0 0.0
  %97 = vmatpush.msra.mxu0 0.0
  %98 = vmatpush.msra.mxu0 0.0
  %99 = vmatpush.msra.mxu0 %v89
  %100 = vmatpush.msra.mxu0 %v78
  %101 = vmatpush.msra.mxu0 %v77
  %102 = vmatpush.msra.mxu0 %v76
  %103 = vmatpush.msra.mxu0 %v75
  %104 = vmatpush.msra.mxu0 %v74
  %105 = vmatpush.msra.mxu0 %v73
  %106 = vmatpush.msra.mxu0 %v72
  %107 = vmatmul.f32.gmra.mxu0 %v82
  %v108 = vpop.f32.mrf.mxu0
  %v109 = vadd.f32 0.0, %v108
  %110 = vmatmul.f32.gmra.mxu0 %v85
  %v111 = vpop.f32.mrf.mxu0
  %v112 = vadd.f32 0.0, %v111
  %113 = vdwg.mxu0
  %v114 = vld [vmem:[%s6] sm:$0x1]
  %v115 = vld [vmem:[%s6 + $0x1] sm:$0x1]
  %vm116 = vcmask 261120
  %v117 = vsel %vm116, %v109, 0.0
  %118 = vadd.xlane.f32.xlu0 %v117
  %v119 = vpop.xlane.xlu0 %118
  %v120 = vsel %vm116, %v112, 0.0
  %121 = vadd.xlane.f32.xlu0 %v120
  %v122 = vpop.xlane.xlu0 %121
  %v123 = vrcp.pop 32.0
  %v124 = vmul.f32 32.0, %v123
  %v125 = vsub.f32 1.0, %v124
  %v126 = vmul.f32 %v123, %v125
  %v127 = vadd.f32 %v123, %v126
  %vm128 = vweird.f32 %v123
  %v129 = vsel %vm128, %v123, %v127
  %v130 = vmul.f32 %v119, %v129
  %v131 = vmul.f32 %v122, %v129
  %v132 = vsub.f32 %v109, %v130
  %v133 = vsub.f32 %v112, %v131
  %v134 = vmul.f32 %v132, %v132
  %v135 = vmul.f32 %v133, %v133
  %v136 = vsel %vm116, %v134, 0.0
  %137 = vadd.xlane.f32.xlu0 %v136
  %v138 = vpop.xlane.xlu0 %137
  %v139 = vsel %vm116, %v135, 0.0
  %140 = vadd.xlane.f32.xlu0 %v139
  %v141 = vpop.xlane.xlu0 %140
  %v142 = vmul.f32 %v138, %v129
  %v143 = vmul.f32 %v141, %v129
  %v144 = vadd.f32 %v142, 1e-12
  %v145 = vadd.f32 %v143, 1e-12
  %v146 = vrsqrt.pop %v144
  %v147 = vmul.f32 %v146, %v144
  %v148 = vmul.f32 %v147, %v146
  %v149 = vmul.f32 0.5, %v148
  %v150 = vsub.f32 1.5, %v149
  %v151 = vmul.f32 %v146, %v150
  %vm152 = vweird.f32 %v144
  %vm153 = vweird.f32 %v146
  %vm154 = vmor %vm152, %vm153
  %v155 = vsel %vm154, %v146, %v151
  %v156 = vrsqrt.pop %v145
  %v157 = vmul.f32 %v156, %v145
  %v158 = vmul.f32 %v157, %v156
  %v159 = vmul.f32 0.5, %v158
  %v160 = vsub.f32 1.5, %v159
  %v161 = vmul.f32 %v156, %v160
  %vm162 = vweird.f32 %v145
  %vm163 = vweird.f32 %v156
  %vm164 = vmor %vm162, %vm163
  %v165 = vsel %vm164, %v156, %v161
  %v166 = vmul.f32 %v132, %v155
  %v167 = vmul.f32 %v133, %v165
  %v168 = vperm.slane %v114, 0
  %v169 = vmul.f32 %v166, %v168
  %v170 = vmul.f32 %v167, %v168
  %v171 = vperm.slane %v115, 0
  %v172 = vadd.f32 %v169, %v171
  %v173 = vadd.f32 %v170, %v171
  %v174 = vld [vmem:[%s4] sm:$0xff]
  %v175 = vld [vmem:[%s4 + $0x10] sm:$0xff]
  %v176 = vld [vmem:[%s4 + $0x20] sm:$0xff]
  %v177 = vld [vmem:[%s4 + $0x30] sm:$0xff]
  %v178 = vld [vmem:[%s6 + $0x2] sm:$0x1]
  %v179 = vperm.slane %v178, 0
  %v181 = vsel %vm116, %v172, 0
  %v184 = vsel %vm116, %v173, 0
  %186 = vmatpush.msra.mxu0 0.0
  %187 = vmatpush.msra.mxu0 0.0
  %188 = vmatpush.msra.mxu0 0.0
  %189 = vmatpush.msra.mxu0 0.0
  %190 = vmatpush.msra.mxu0 0.0
  %191 = vmatpush.msra.mxu0 0.0
  %192 = vmatpush.msra.mxu0 0.0
  %193 = vmatpush.msra.mxu0 0.0
  %194 = vmatpush.msra.mxu0 0.0
  %195 = vmatpush.msra.mxu0 0.0
  %196 = vmatpush.msra.mxu0 0.0
  %197 = vmatpush.msra.mxu0 0.0
  %198 = vmatpush.msra.mxu0 %v177
  %199 = vmatpush.msra.mxu0 %v176
  %200 = vmatpush.msra.mxu0 %v175
  %201 = vmatpush.msra.mxu0 %v174
  %202 = vmatmul.f32.gmra.mxu0 %v181
  %v203 = vpop.f32.mrf.mxu0
  %v204 = vadd.f32 %v179, %v203
  %205 = vmatmul.f32.gmra.mxu0 %v184
  %v206 = vpop.f32.mrf.mxu0
  %v207 = vadd.f32 %v179, %v206
  %208 = vdwg.mxu0
  %v209 = vld [vmem:[%s6 + $0x3] sm:$0x1]
  %v210 = vperm.slane %v209, 0
  %215 = vrot.lane.b32.xlu0 %v174, 96
  %v216 = vpop.permute.xlu0 %215
  %217 = vrot.lane.b32.xlu0 %v175, 96
  %v218 = vpop.permute.xlu0 %217
  %219 = vrot.lane.b32.xlu0 %v176, 96
  %v220 = vpop.permute.xlu0 %219
  %221 = vrot.lane.b32.xlu0 %v177, 96
  %v222 = vpop.permute.xlu0 %221
  %227 = vmatpush.msra.mxu0 0.0
  %228 = vmatpush.msra.mxu0 0.0
  %229 = vmatpush.msra.mxu0 0.0
  %230 = vmatpush.msra.mxu0 0.0
  %231 = vmatpush.msra.mxu0 0.0
  %232 = vmatpush.msra.mxu0 0.0
  %233 = vmatpush.msra.mxu0 0.0
  %234 = vmatpush.msra.mxu0 0.0
  %235 = vmatpush.msra.mxu0 0.0
  %236 = vmatpush.msra.mxu0 0.0
  %237 = vmatpush.msra.mxu0 0.0
  %238 = vmatpush.msra.mxu0 0.0
  %239 = vmatpush.msra.mxu0 %v222
  %240 = vmatpush.msra.mxu0 %v220
  %241 = vmatpush.msra.mxu0 %v218
  %242 = vmatpush.msra.mxu0 %v216
  %243 = vmatmul.f32.gmra.mxu0 %v181
  %v244 = vpop.f32.mrf.mxu0
  %v245 = vadd.f32 %v210, %v244
  %246 = vmatmul.f32.gmra.mxu0 %v184
  %v247 = vpop.f32.mrf.mxu0
  %v248 = vadd.f32 %v210, %v247
  %249 = vdwg.mxu0
  %v250 = vld [vmem:[%s6 + $0x4] sm:$0x1]
  %v251 = vperm.slane %v250, 0
  %252 = vrot.lane.b32.xlu0 %v174, 64
  %v253 = vpop.permute.xlu0 %252
  %254 = vrot.lane.b32.xlu0 %v175, 64
  %v255 = vpop.permute.xlu0 %254
  %256 = vrot.lane.b32.xlu0 %v176, 64
  %v257 = vpop.permute.xlu0 %256
  %258 = vrot.lane.b32.xlu0 %v177, 64
  %v259 = vpop.permute.xlu0 %258
  %264 = vmatpush.msra.mxu0 0.0
  %265 = vmatpush.msra.mxu0 0.0
  %266 = vmatpush.msra.mxu0 0.0
  %267 = vmatpush.msra.mxu0 0.0
  %268 = vmatpush.msra.mxu0 0.0
  %269 = vmatpush.msra.mxu0 0.0
  %270 = vmatpush.msra.mxu0 0.0
  %271 = vmatpush.msra.mxu0 0.0
  %272 = vmatpush.msra.mxu0 0.0
  %273 = vmatpush.msra.mxu0 0.0
  %274 = vmatpush.msra.mxu0 0.0
  %275 = vmatpush.msra.mxu0 0.0
  %276 = vmatpush.msra.mxu0 %v259
  %277 = vmatpush.msra.mxu0 %v257
  %278 = vmatpush.msra.mxu0 %v255
  %279 = vmatpush.msra.mxu0 %v253
  %280 = vmatmul.f32.gmra.mxu0 %v181
  %v281 = vpop.f32.mrf.mxu0
  %v282 = vadd.f32 %v251, %v281
  %283 = vmatmul.f32.gmra.mxu0 %v184
  %v284 = vpop.f32.mrf.mxu0
  %v285 = vadd.f32 %v251, %v284
  %286 = vdwg.mxu0
  %v287 = vld [vmem:[%s2] sm:$0x1]
  %v288 = vsub.f32 1.0, %v287
  %v289 = vmul.f32 %v288, -1e+09
  %v290 = vperm.slane %v289, 0
  %vm291 = vcmask 130048
  %v293 = vsel %vm291, %v204, 0
  %v296 = vsel %vm291, %v245, 0
  %298 = vmatpush.xpose.msra.mxu0 0.0
  %299 = vmatpush.xpose.msra.mxu0 0.0
  %300 = vmatpush.xpose.msra.mxu0 0.0
  %301 = vmatpush.xpose.msra.mxu0 0.0
  %302 = vmatpush.xpose.msra.mxu0 0.0
  %303 = vmatpush.xpose.msra.mxu0 0.0
  %304 = vmatpush.xpose.msra.mxu0 0.0
  %305 = vmatpush.xpose.msra.mxu0 0.0
  %306 = vmatpush.xpose.msra.mxu0 0.0
  %307 = vmatpush.xpose.msra.mxu0 0.0
  %308 = vmatpush.xpose.msra.mxu0 0.0
  %309 = vmatpush.xpose.msra.mxu0 0.0
  %310 = vmatpush.xpose.msra.mxu0 0.0
  %311 = vmatpush.xpose.msra.mxu0 0.0
  %312 = vmatpush.xpose.msra.mxu0 0.0
  %313 = vmatpush.xpose.msra.mxu0 %v296
  %314 = vmatmul.f32.gmra.mxu0 %v293
  %v315 = vpop.f32.mrf.mxu0
  %v316 = vadd.f32 %v290, %v315
  %317 = vdwg.mxu0
  %vm318 = vcmask 64512
  %v319 = vsel %vm318, %v316, -inf
  %320 = vmax.xlane.f32.xlu0 %v319
  %v321 = vpop.xlane.xlu0 %320
  %v322 = vsub.f32 %v316, %v321
  %v323 = vmul.f32 %v322, 1.442695
  %v324 = vpow.pop %v323
  %v325 = vsel %vm318, %v324, 0.0
  %326 = vadd.xlane.f32.xlu0 %v325
  %v327 = vpop.xlane.xlu0 %326
  %v328 = vrcp.pop %v327
  %v329 = vmul.f32 %v327, %v328
  %v330 = vsub.f32 1.0, %v329
  %v331 = vmul.f32 %v328, %v330
  %v332 = vadd.f32 %v328, %v331
  %vm333 = vweird.f32 %v327
  %vm334 = vweird.f32 %v328
  %vm335 = vmor %vm333, %vm334
  %v336 = vsel %vm335, %v328, %v332
  %v337 = vand.u32 2147483647, %v327
  %vm338 = vcmp.eq.f32.partialorder %v337, 8.507059e+37
  %v339 = vand.u32 %v327, 2147483648
  %v340 = vor.u32 1.1754944e-38, %v339
  %v341 = vsel %vm338, %v340, %v336
  %v342 = vmul.f32 %v324, %v341
  %v344 = vsel %vm318, %v342, 0
  %346 = vmatpush.msra.mxu0 0.0
  %347 = vmatpush.msra.mxu0 0.0
  %348 = vmatpush.msra.mxu0 0.0
  %349 = vmatpush.msra.mxu0 0.0
  %350 = vmatpush.msra.mxu0 0.0
  %351 = vmatpush.msra.mxu0 0.0
  %352 = vmatpush.msra.mxu0 0.0
  %353 = vmatpush.msra.mxu0 0.0
  %354 = vmatpush.msra.mxu0 0.0
  %355 = vmatpush.msra.mxu0 0.0
  %356 = vmatpush.msra.mxu0 0.0
  %357 = vmatpush.msra.mxu0 0.0
  %358 = vmatpush.msra.mxu0 0.0
  %359 = vmatpush.msra.mxu0 0.0
  %360 = vmatpush.msra.mxu0 0.0
  %361 = vmatpush.msra.mxu0 %v282
  %362 = vmatmul.f32.gmra.mxu0 %v344
  %v363 = vpop.f32.mrf.mxu0
  %v364 = vadd.f32 0.0, %v363
  %365 = vdwg.mxu0
  %366 = vst.msk [vmem:[#allocation2] sm:$0xff] %vm291, %v364
  %367 = vrot.lane.b32.xlu0 %v204, 112
  %v368 = vpop.permute.xlu0 %367
  %369 = vrot.lane.b32.xlu0 %v245, 112
  %v370 = vpop.permute.xlu0 %369
  %v371 = vsel %vm291, %v368, 0
  %v373 = vsel %vm291, %v370, 0
  %375 = vmatpush.xpose.msra.mxu0 0.0
  %376 = vmatpush.xpose.msra.mxu0 0.0
  %377 = vmatpush.xpose.msra.mxu0 0.0
  %378 = vmatpush.xpose.msra.mxu0 0.0
  %379 = vmatpush.xpose.msra.mxu0 0.0
  %380 = vmatpush.xpose.msra.mxu0 0.0
  %381 = vmatpush.xpose.msra.mxu0 0.0
  %382 = vmatpush.xpose.msra.mxu0 0.0
  %383 = vmatpush.xpose.msra.mxu0 0.0
  %384 = vmatpush.xpose.msra.mxu0 0.0
  %385 = vmatpush.xpose.msra.mxu0 0.0
  %386 = vmatpush.xpose.msra.mxu0 0.0
  %387 = vmatpush.xpose.msra.mxu0 0.0
  %388 = vmatpush.xpose.msra.mxu0 0.0
  %389 = vmatpush.xpose.msra.mxu0 0.0
  %390 = vmatpush.xpose.msra.mxu0 %v373
  %391 = vmatmul.f32.gmra.mxu0 %v371
  %v392 = vpop.f32.mrf.mxu0
  %v393 = vadd.f32 %v290, %v392
  %394 = vdwg.mxu0
  %v395 = vsel %vm318, %v393, -inf
  %396 = vmax.xlane.f32.xlu0 %v395
  %v397 = vpop.xlane.xlu0 %396
  %v398 = vsub.f32 %v393, %v397
  %v399 = vmul.f32 %v398, 1.442695
  %v400 = vpow.pop %v399
  %v401 = vsel %vm318, %v400, 0.0
  %402 = vadd.xlane.f32.xlu0 %v401
  %v403 = vpop.xlane.xlu0 %402
  %v404 = vrcp.pop %v403
  %v405 = vmul.f32 %v403, %v404
  %v406 = vsub.f32 1.0, %v405
  %v407 = vmul.f32 %v404, %v406
  %v408 = vadd.f32 %v404, %v407
  %vm409 = vweird.f32 %v403
  %vm410 = vweird.f32 %v404
  %vm411 = vmor %vm409, %vm410
  %v412 = vsel %vm411, %v404, %v408
  %v413 = vand.u32 2147483647, %v403
  %vm414 = vcmp.eq.f32.partialorder %v413, 8.507059e+37
  %v415 = vand.u32 %v403, 2147483648
  %v416 = vor.u32 1.1754944e-38, %v415
  %v417 = vsel %vm414, %v416, %v412
  %v418 = vmul.f32 %v400, %v417
  %420 = vrot.lane.b32.xlu0 %v282, 112
  %v421 = vpop.permute.xlu0 %420
  %v424 = vsel %vm318, %v418, 0
  %426 = vmatpush.msra.mxu0 0.0
  %427 = vmatpush.msra.mxu0 0.0
  %428 = vmatpush.msra.mxu0 0.0
  %429 = vmatpush.msra.mxu0 0.0
  %430 = vmatpush.msra.mxu0 0.0
  %431 = vmatpush.msra.mxu0 0.0
  %432 = vmatpush.msra.mxu0 0.0
  %433 = vmatpush.msra.mxu0 0.0
  %434 = vmatpush.msra.mxu0 0.0
  %435 = vmatpush.msra.mxu0 0.0
  %436 = vmatpush.msra.mxu0 0.0
  %437 = vmatpush.msra.mxu0 0.0
  %438 = vmatpush.msra.mxu0 0.0
  %439 = vmatpush.msra.mxu0 0.0
  %440 = vmatpush.msra.mxu0 0.0
  %441 = vmatpush.msra.mxu0 %v421
  %442 = vmatmul.f32.gmra.mxu0 %v424
  %v443 = vpop.f32.mrf.mxu0
  %v444 = vadd.f32 0.0, %v443
  %445 = vdwg.mxu0
  %447 = vrot.lane.b32.xlu0 %v444, 16
  %v448 = vpop.permute.xlu0 %447
  %vm450 = vcmask 261248
  %451 = vst.msk [vmem:[#allocation2] sm:$0xff] %vm450, %v448
  %v452 = vld [vmem:[%s2 + $0x1] sm:$0x1]
  %v453 = vsub.f32 1.0, %v452
  %v454 = vmul.f32 %v453, -1e+09
  %v455 = vperm.slane %v454, 0
  %v457 = vsel %vm291, %v207, 0
  %v460 = vsel %vm291, %v248, 0
  %462 = vmatpush.xpose.msra.mxu0 0.0
  %463 = vmatpush.xpose.msra.mxu0 0.0
  %464 = vmatpush.xpose.msra.mxu0 0.0
  %465 = vmatpush.xpose.msra.mxu0 0.0
  %466 = vmatpush.xpose.msra.mxu0 0.0
  %467 = vmatpush.xpose.msra.mxu0 0.0
  %468 = vmatpush.xpose.msra.mxu0 0.0
  %469 = vmatpush.xpose.msra.mxu0 0.0
  %470 = vmatpush.xpose.msra.mxu0 0.0
  %471 = vmatpush.xpose.msra.mxu0 0.0
  %472 = vmatpush.xpose.msra.mxu0 0.0
  %473 = vmatpush.xpose.msra.mxu0 0.0
  %474 = vmatpush.xpose.msra.mxu0 0.0
  %475 = vmatpush.xpose.msra.mxu0 0.0
  %476 = vmatpush.xpose.msra.mxu0 0.0
  %477 = vmatpush.xpose.msra.mxu0 %v460
  %478 = vmatmul.f32.gmra.mxu0 %v457
  %v479 = vpop.f32.mrf.mxu0
  %v480 = vadd.f32 %v455, %v479
  %481 = vdwg.mxu0
  %v482 = vsel %vm318, %v480, -inf
  %483 = vmax.xlane.f32.xlu0 %v482
  %v484 = vpop.xlane.xlu0 %483
  %v485 = vsub.f32 %v480, %v484
  %v486 = vmul.f32 %v485, 1.442695
  %v487 = vpow.pop %v486
  %v488 = vsel %vm318, %v487, 0.0
  %489 = vadd.xlane.f32.xlu0 %v488
  %v490 = vpop.xlane.xlu0 %489
  %v491 = vrcp.pop %v490
  %v492 = vmul.f32 %v490, %v491
  %v493 = vsub.f32 1.0, %v492
  %v494 = vmul.f32 %v491, %v493
  %v495 = vadd.f32 %v491, %v494
  %vm496 = vweird.f32 %v490
  %vm497 = vweird.f32 %v491
  %vm498 = vmor %vm496, %vm497
  %v499 = vsel %vm498, %v491, %v495
  %v500 = vand.u32 2147483647, %v490
  %vm501 = vcmp.eq.f32.partialorder %v500, 8.507059e+37
  %v502 = vand.u32 %v490, 2147483648
  %v503 = vor.u32 1.1754944e-38, %v502
  %v504 = vsel %vm501, %v503, %v499
  %v505 = vmul.f32 %v487, %v504
  %v507 = vsel %vm318, %v505, 0
  %509 = vmatpush.msra.mxu0 0.0
  %510 = vmatpush.msra.mxu0 0.0
  %511 = vmatpush.msra.mxu0 0.0
  %512 = vmatpush.msra.mxu0 0.0
  %513 = vmatpush.msra.mxu0 0.0
  %514 = vmatpush.msra.mxu0 0.0
  %515 = vmatpush.msra.mxu0 0.0
  %516 = vmatpush.msra.mxu0 0.0
  %517 = vmatpush.msra.mxu0 0.0
  %518 = vmatpush.msra.mxu0 0.0
  %519 = vmatpush.msra.mxu0 0.0
  %520 = vmatpush.msra.mxu0 0.0
  %521 = vmatpush.msra.mxu0 0.0
  %522 = vmatpush.msra.mxu0 0.0
  %523 = vmatpush.msra.mxu0 0.0
  %524 = vmatpush.msra.mxu0 %v285
  %525 = vmatmul.f32.gmra.mxu0 %v507
  %v526 = vpop.f32.mrf.mxu0
  %v527 = vadd.f32 0.0, %v526
  %528 = vdwg.mxu0
  %529 = vst.msk [vmem:[#allocation2 + $0x8] sm:$0xff] %vm291, %v527
  %530 = vrot.lane.b32.xlu0 %v207, 112
  %v531 = vpop.permute.xlu0 %530
  %532 = vrot.lane.b32.xlu0 %v248, 112
  %v533 = vpop.permute.xlu0 %532
  %v534 = vsel %vm291, %v531, 0
  %v536 = vsel %vm291, %v533, 0
  %538 = vmatpush.xpose.msra.mxu0 0.0
  %539 = vmatpush.xpose.msra.mxu0 0.0
  %540 = vmatpush.xpose.msra.mxu0 0.0
  %541 = vmatpush.xpose.msra.mxu0 0.0
  %542 = vmatpush.xpose.msra.mxu0 0.0
  %543 = vmatpush.xpose.msra.mxu0 0.0
  %544 = vmatpush.xpose.msra.mxu0 0.0
  %545 = vmatpush.xpose.msra.mxu0 0.0
  %546 = vmatpush.xpose.msra.mxu0 0.0
  %547 = vmatpush.xpose.msra.mxu0 0.0
  %548 = vmatpush.xpose.msra.mxu0 0.0
  %549 = vmatpush.xpose.msra.mxu0 0.0
  %550 = vmatpush.xpose.msra.mxu0 0.0
  %551 = vmatpush.xpose.msra.mxu0 0.0
  %552 = vmatpush.xpose.msra.mxu0 0.0
  %553 = vmatpush.xpose.msra.mxu0 %v536
  %554 = vmatmul.f32.gmra.mxu0 %v534
  %v555 = vpop.f32.mrf.mxu0
  %v556 = vadd.f32 %v455, %v555
  %557 = vdwg.mxu0
  %v558 = vsel %vm318, %v556, -inf
  %559 = vmax.xlane.f32.xlu0 %v558
  %v560 = vpop.xlane.xlu0 %559
  %v561 = vsub.f32 %v556, %v560
  %v562 = vmul.f32 %v561, 1.442695
  %v563 = vpow.pop %v562
  %v564 = vsel %vm318, %v563, 0.0
  %565 = vadd.xlane.f32.xlu0 %v564
  %v566 = vpop.xlane.xlu0 %565
  %v567 = vrcp.pop %v566
  %v568 = vmul.f32 %v566, %v567
  %v569 = vsub.f32 1.0, %v568
  %v570 = vmul.f32 %v567, %v569
  %v571 = vadd.f32 %v567, %v570
  %vm572 = vweird.f32 %v566
  %vm573 = vweird.f32 %v567
  %vm574 = vmor %vm572, %vm573
  %v575 = vsel %vm574, %v567, %v571
  %v576 = vand.u32 2147483647, %v566
  %vm577 = vcmp.eq.f32.partialorder %v576, 8.507059e+37
  %v578 = vand.u32 %v566, 2147483648
  %v579 = vor.u32 1.1754944e-38, %v578
  %v580 = vsel %vm577, %v579, %v575
  %v581 = vmul.f32 %v563, %v580
  %583 = vrot.lane.b32.xlu0 %v285, 112
  %v584 = vpop.permute.xlu0 %583
  %v587 = vsel %vm318, %v581, 0
  %589 = vmatpush.msra.mxu0 0.0
  %590 = vmatpush.msra.mxu0 0.0
  %591 = vmatpush.msra.mxu0 0.0
  %592 = vmatpush.msra.mxu0 0.0
  %593 = vmatpush.msra.mxu0 0.0
  %594 = vmatpush.msra.mxu0 0.0
  %595 = vmatpush.msra.mxu0 0.0
  %596 = vmatpush.msra.mxu0 0.0
  %597 = vmatpush.msra.mxu0 0.0
  %598 = vmatpush.msra.mxu0 0.0
  %599 = vmatpush.msra.mxu0 0.0
  %600 = vmatpush.msra.mxu0 0.0
  %601 = vmatpush.msra.mxu0 0.0
  %602 = vmatpush.msra.mxu0 0.0
  %603 = vmatpush.msra.mxu0 0.0
  %604 = vmatpush.msra.mxu0 %v584
  %605 = vmatmul.f32.gmra.mxu0 %v587
  %v606 = vpop.f32.mrf.mxu0
  %v607 = vadd.f32 0.0, %v606
  %608 = vdwg.mxu0
  %610 = vrot.lane.b32.xlu0 %v607, 16
  %v611 = vpop.permute.xlu0 %610
  %613 = vst.msk [vmem:[#allocation2 + $0x8] sm:$0xff] %vm450, %v611
  %v614 = vld [vmem:[#allocation2] sm:$0xff]
  %v615 = vld [vmem:[#allocation2 + $0x8] sm:$0xff]
  %v616 = vld [vmem:[%s4] sm:$0xff]
  %v617 = vld [vmem:[%s4 + $0x10] sm:$0xff]
  %v618 = vld [vmem:[%s4 + $0x20] sm:$0xff]
  %v619 = vld [vmem:[%s4 + $0x30] sm:$0xff]
  %v620 = vld [vmem:[%s6 + $0x5] sm:$0x1]
  %v621 = vperm.slane %v620, 0
  %626 = vrot.lane.b32.xlu0 %v616, 32
  %v627 = vpop.permute.xlu0 %626
  %628 = vrot.lane.b32.xlu0 %v617, 32
  %v629 = vpop.permute.xlu0 %628
  %630 = vrot.lane.b32.xlu0 %v618, 32
  %v631 = vpop.permute.xlu0 %630
  %632 = vrot.lane.b32.xlu0 %v619, 32
  %v633 = vpop.permute.xlu0 %632
  %v639 = vsel %vm116, %v614, 0
  %v642 = vsel %vm116, %v615, 0
  %644 = vmatpush.msra.mxu0 0.0
  %645 = vmatpush.msra.mxu0 0.0
  %646 = vmatpush.msra.mxu0 0.0
  %647 = vmatpush.msra.mxu0 0.0
  %648 = vmatpush.msra.mxu0 0.0
  %649 = vmatpush.msra.mxu0 0.0
  %650 = vmatpush.msra.mxu0 0.0
  %651 = vmatpush.msra.mxu0 0.0
  %652 = vmatpush.msra.mxu0 0.0
  %653 = vmatpush.msra.mxu0 0.0
  %654 = vmatpush.msra.mxu0 0.0
  %655 = vmatpush.msra.mxu0 0.0
  %656 = vmatpush.msra.mxu0 %v633
  %657 = vmatpush.msra.mxu0 %v631
  %658 = vmatpush.msra.mxu0 %v629
  %659 = vmatpush.msra.mxu0 %v627
  %660 = vmatmul.f32.gmra.mxu0 %v639
  %v661 = vpop.f32.mrf.mxu0
  %v662 = vadd.f32 %v621, %v661
  %663 = vmatmul.f32.gmra.mxu0 %v642
  %v664 = vpop.f32.mrf.mxu0
  %v665 = vadd.f32 %v621, %v664
  %666 = vdwg.mxu0
  %v667 = vadd.f32 %v172, %v662
  %v668 = vadd.f32 %v173, %v665
  %v669 = vld [vmem:[%s6 + $0x6] sm:$0x1]
  %v670 = vld [vmem:[%s6 + $0x7] sm:$0x1]
  %v671 = vsel %vm116, %v667, 0.0
  %672 = vadd.xlane.f32.xlu0 %v671
  %v673 = vpop.xlane.xlu0 %672
  %v674 = vsel %vm116, %v668, 0.0
  %675 = vadd.xlane.f32.xlu0 %v674
  %v676 = vpop.xlane.xlu0 %675
  %v677 = vmul.f32 %v673, %v129
  %v678 = vmul.f32 %v676, %v129
  %v679 = vsub.f32 %v667, %v677
  %v680 = vsub.f32 %v668, %v678
  %v681 = vmul.f32 %v679, %v679
  %v682 = vmul.f32 %v680, %v680
  %v683 = vsel %vm116, %v681, 0.0
  %684 = vadd.xlane.f32.xlu0 %v683
  %v685 = vpop.xlane.xlu0 %684
  %v686 = vsel %vm116, %v682, 0.0
  %687 = vadd.xlane.f32.xlu0 %v686
  %v688 = vpop.xlane.xlu0 %687
  %v689 = vmul.f32 %v685, %v129
  %v690 = vmul.f32 %v688, %v129
  %v691 = vadd.f32 %v689, 1e-12
  %v692 = vadd.f32 %v690, 1e-12
  %v693 = vrsqrt.pop %v691
  %v694 = vmul.f32 %v693, %v691
  %v695 = vmul.f32 %v694, %v693
  %v696 = vmul.f32 0.5, %v695
  %v697 = vsub.f32 1.5, %v696
  %v698 = vmul.f32 %v693, %v697
  %vm699 = vweird.f32 %v691
  %vm700 = vweird.f32 %v693
  %vm701 = vmor %vm699, %vm700
  %v702 = vsel %vm701, %v693, %v698
  %v703 = vrsqrt.pop %v692
  %v704 = vmul.f32 %v703, %v692
  %v705 = vmul.f32 %v704, %v703
  %v706 = vmul.f32 0.5, %v705
  %v707 = vsub.f32 1.5, %v706
  %v708 = vmul.f32 %v703, %v707
  %vm709 = vweird.f32 %v692
  %vm710 = vweird.f32 %v703
  %vm711 = vmor %vm709, %vm710
  %v712 = vsel %vm711, %v703, %v708
  %v713 = vmul.f32 %v679, %v702
  %v714 = vmul.f32 %v680, %v712
  %v715 = vperm.slane %v669, 0
  %v716 = vmul.f32 %v713, %v715
  %v717 = vmul.f32 %v714, %v715
  %v718 = vperm.slane %v670, 0
  %v719 = vadd.f32 %v716, %v718
  %v720 = vadd.f32 %v717, %v718
  %v721 = vld [vmem:[%s4 + $0x8] sm:$0xff]
  %v722 = vld [vmem:[%s4 + $0x18] sm:$0xff]
  %v723 = vld [vmem:[%s4 + $0x28] sm:$0xff]
  %v724 = vld [vmem:[%s4 + $0x38] sm:$0xff]
  %v725 = vld [vmem:[%s6 + $0x8] sm:$0x1]
  %v726 = vperm.slane %v725, 0
  %v728 = vsel %vm116, %v719, 0
  %v731 = vsel %vm116, %v720, 0
  %733 = vmatpush.msra.mxu0 0.0
  %734 = vmatpush.msra.mxu0 0.0
  %735 = vmatpush.msra.mxu0 0.0
  %736 = vmatpush.msra.mxu0 0.0
  %737 = vmatpush.msra.mxu0 0.0
  %738 = vmatpush.msra.mxu0 0.0
  %739 = vmatpush.msra.mxu0 0.0
  %740 = vmatpush.msra.mxu0 0.0
  %741 = vmatpush.msra.mxu0 0.0
  %742 = vmatpush.msra.mxu0 0.0
  %743 = vmatpush.msra.mxu0 0.0
  %744 = vmatpush.msra.mxu0 0.0
  %745 = vmatpush.msra.mxu0 %v724
  %746 = vmatpush.msra.mxu0 %v723
  %747 = vmatpush.msra.mxu0 %v722
  %748 = vmatpush.msra.mxu0 %v721
  %749 = vmatmul.f32.gmra.mxu0 %v728
  %v750 = vpop.f32.mrf.mxu0
  %v751 = vadd.f32 %v726, %v750
  %752 = vmatmul.f32.gmra.mxu0 %v731
  %v753 = vpop.f32.mrf.mxu0
  %v754 = vadd.f32 %v726, %v753
  %755 = vdwg.mxu0
  %v756 = vmul.f32 %v751, 0.5
  %v757 = vmul.f32 %v754, 0.5
  %v758 = vmul.f32 %v751, 0.044715
  %v759 = vmul.f32 %v754, 0.044715
  %v760 = vmul.f32 %v758, %v751
  %v761 = vmul.f32 %v759, %v754
  %v762 = vmul.f32 %v760, %v751
  %v763 = vmul.f32 %v761, %v754
  %v764 = vadd.f32 %v751, %v762
  %v765 = vadd.f32 %v754, %v763
  %v766 = vmul.f32 %v764, 0.7978846
  %v767 = vmul.f32 %v765, 0.7978846
  %v768 = vtanh.pop %v766
  %v769 = vtanh.pop %v767
  %v770 = vadd.f32 %v768, 1.0
  %v771 = vadd.f32 %v769, 1.0
  %v772 = vmul.f32 %v756, %v770
  %v773 = vmul.f32 %v757, %v771
  %v774 = vld [vmem:[%s5] sm:$0xff]
  %v775 = vld [vmem:[%s5 + $0x8] sm:$0xff]
  %v776 = vld [vmem:[%s5 + $0x10] sm:$0xff]
  %v777 = vld [vmem:[%s5 + $0x18] sm:$0xff]
  %v778 = vld [vmem:[%s5 + $0x20] sm:$0xff]
  %v779 = vld [vmem:[%s5 + $0x28] sm:$0xff]
  %v780 = vld [vmem:[%s5 + $0x30] sm:$0xff]
  %v781 = vld [vmem:[%s5 + $0x38] sm:$0xff]
  %v782 = vld [vmem:[%s6 + $0x9] sm:$0x1]
  %v783 = vperm.slane %v782, 0
  %vm784 = vcmask 523264
  %v786 = vsel %vm784, %v772, 0
  %v789 = vsel %vm784, %v773, 0
  %791 = vmatpush.msra.mxu0 0.0
  %792 = vmatpush.msra.mxu0 0.0
  %793 = vmatpush.msra.mxu0 0.0
  %794 = vmatpush.msra.mxu0 0.0
  %795 = vmatpush.msra.mxu0 0.0
  %796 = vmatpush.msra.mxu0 0.0
  %797 = vmatpush.msra.mxu0 0.0
  %798 = vmatpush.msra.mxu0 0.0
  %799 = vmatpush.msra.mxu0 %v781
  %800 = vmatpush.msra.mxu0 %v780
  %801 = vmatpush.msra.mxu0 %v779
  %802 = vmatpush.msra.mxu0 %v778
  %803 = vmatpush.msra.mxu0 %v777
  %804 = vmatpush.msra.mxu0 %v776
  %805 = vmatpush.msra.mxu0 %v775
  %806 = vmatpush.msra.mxu0 %v774
  %807 = vmatmul.f32.gmra.mxu0 %v786
  %v808 = vpop.f32.mrf.mxu0
  %v809 = vadd.f32 %v783, %v808
  %810 = vmatmul.f32.gmra.mxu0 %v789
  %v811 = vpop.f32.mrf.mxu0
  %v812 = vadd.f32 %v783, %v811
  %813 = vdwg.mxu0
  %v814 = vadd.f32 %v719, %v809
  %v815 = vadd.f32 %v720, %v812
  %v816 = vld [vmem:[%s6 + $0xa] sm:$0x1]
  %v817 = vld [vmem:[%s6 + $0xb] sm:$0x1]
  %v818 = vsel %vm116, %v814, 0.0
  %819 = vadd.xlane.f32.xlu0 %v818
  %v820 = vpop.xlane.xlu0 %819
  %v821 = vsel %vm116, %v815, 0.0
  %822 = vadd.xlane.f32.xlu0 %v821
  %v823 = vpop.xlane.xlu0 %822
  %v824 = vmul.f32 %v820, %v129
  %v825 = vmul.f32 %v823, %v129
  %v826 = vsub.f32 %v814, %v824
  %v827 = vsub.f32 %v815, %v825
  %v828 = vmul.f32 %v826, %v826
  %v829 = vmul.f32 %v827, %v827
  %v830 = vsel %vm116, %v828, 0.0
  %831 = vadd.xlane.f32.xlu0 %v830
  %v832 = vpop.xlane.xlu0 %831
  %v833 = vsel %vm116, %v829, 0.0
  %834 = vadd.xlane.f32.xlu0 %v833
  %v835 = vpop.xlane.xlu0 %834
  %v836 = vmul.f32 %v832, %v129
  %v837 = vmul.f32 %v835, %v129
  %v838 = vadd.f32 %v836, 1e-12
  %v839 = vadd.f32 %v837, 1e-12
  %v840 = vrsqrt.pop %v838
  %v841 = vmul.f32 %v840, %v838
  %v842 = vmul.f32 %v841, %v840
  %v843 = vmul.f32 0.5, %v842
  %v844 = vsub.f32 1.5, %v843
  %v845 = vmul.f32 %v840, %v844
  %vm846 = vweird.f32 %v838
  %vm847 = vweird.f32 %v840
  %vm848 = vmor %vm846, %vm847
  %v849 = vsel %vm848, %v840, %v845
  %v850 = vrsqrt.pop %v839
  %v851 = vmul.f32 %v850, %v839
  %v852 = vmul.f32 %v851, %v850
  %v853 = vmul.f32 0.5, %v852
  %v854 = vsub.f32 1.5, %v853
  %v855 = vmul.f32 %v850, %v854
  %vm856 = vweird.f32 %v839
  %vm857 = vweird.f32 %v850
  %vm858 = vmor %vm856, %vm857
  %v859 = vsel %vm858, %v850, %v855
  %v860 = vmul.f32 %v826, %v849
  %v861 = vmul.f32 %v827, %v859
  %v862 = vperm.slane %v816, 0
  %v863 = vmul.f32 %v860, %v862
  %v864 = vmul.f32 %v861, %v862
  %v865 = vperm.slane %v817, 0
  %v866 = vadd.f32 %v863, %v865
  %v867 = vadd.f32 %v864, %v865
  %v868 = vlaneseq
  %v869 = vshrl.u32 %v868, 7
  %v870 = vmul.u32 %v869, 8
  %vm871 = vcmp.ge.s32.totalorder %v31, %v870
  %v872 = vadd.s32 %v870, 8
  %vm873 = vcmp.lt.s32.totalorder %v31, %v872
  %vm874 = vmand %vm871, %vm873
  %v875 = vsel %vm874, 1, 0
  %v876 = vcvt.s32.f32 %v875
  %878 = vset.pattern.permute.xlu0 0
  %879 = vperm.xlu0 %878, %v28
  %v880 = vpop.permute.xlu0 %879
  %883 = vset.pattern.permute.xlu0 0
  %884 = vperm.xlu0 %883, %v29
  %v885 = vpop.permute.xlu0 %884
  %v887 = vmul.f32 %v866, %v880
  %v888 = vmul.f32 %v867, %v885
  %v890 = vsel %vm291, %v876, 0
  %892 = vmatpush.msra.mxu0 0.0
  %893 = vmatpush.msra.mxu0 0.0
  %894 = vmatpush.msra.mxu0 0.0
  %895 = vmatpush.msra.mxu0 0.0
  %896 = vmatpush.msra.mxu0 0.0
  %897 = vmatpush.msra.mxu0 0.0
  %898 = vmatpush.msra.mxu0 0.0
  %899 = vmatpush.msra.mxu0 0.0
  %900 = vmatpush.msra.mxu0 0.0
  %901 = vmatpush.msra.mxu0 0.0
  %902 = vmatpush.msra.mxu0 0.0
  %903 = vmatpush.msra.mxu0 0.0
  %904 = vmatpush.msra.mxu0 0.0
  %905 = vmatpush.msra.mxu0 0.0
  %906 = vmatpush.msra.mxu0 %v888
  %907 = vmatpush.msra.mxu0 %v887
  %908 = vmatmul.f32.gmra.mxu0 %v890
  %v909 = vpop.f32.mrf.mxu0
  %v910 = vadd.f32 0.0, %v909
  %911 = vdwg.mxu0
  %912 = vmatpush.msra.mxu0 0.0
  %913 = vmatpush.msra.mxu0 0.0
  %914 = vmatpush.msra.mxu0 0.0
  %915 = vmatpush.msra.mxu0 0.0
  %916 = vmatpush.msra.mxu0 0.0
  %917 = vmatpush.msra.mxu0 0.0
  %918 = vmatpush.msra.mxu0 0.0
  %919 = vmatpush.msra.mxu0 0.0
  %920 = vmatpush.msra.mxu0 0.0
  %921 = vmatpush.msra.mxu0 0.0
  %922 = vmatpush.msra.mxu0 0.0
  %923 = vmatpush.msra.mxu0 0.0
  %924 = vmatpush.msra.mxu0 0.0
  %925 = vmatpush.msra.mxu0 0.0
  %926 = vmatpush.msra.mxu0 %v29
  %927 = vmatpush.msra.mxu0 %v28
  %928 = vmatmul.f32.gmra.mxu0 %v890
  %v929 = vpop.f32.mrf.mxu0
  %v930 = vadd.f32 0.0, %v929
  %931 = vdwg.mxu0
  %v932 = vmax.f32 %v930, 1e-09
  %934 = vset.pattern.permute.xlu0 0
  %935 = vperm.xlu0 %934, %v932
  %v936 = vpop.permute.xlu0 %935
  %v938 = vrcp.pop %v936
  %v939 = vmul.f32 %v936, %v938
  %v940 = vsub.f32 1.0, %v939
  %v941 = vmul.f32 %v938, %v940
  %v942 = vadd.f32 %v938, %v941
  %vm943 = vweird.f32 %v936
  %vm944 = vweird.f32 %v938
  %vm945 = vmor %vm943, %vm944
  %v946 = vsel %vm945, %v938, %v942
  %v947 = vand.u32 2147483647, %v936
  %vm948 = vcmp.eq.f32.partialorder %v947, 8.507059e+37
  %v949 = vand.u32 %v936, 2147483648
  %v950 = vor.u32 1.1754944e-38, %v949
  %v951 = vsel %vm948, %v950, %v946
  %v952 = vmul.f32 %v910, %v951
  %v953 = vld [vmem:[%s6 + $0xc] sm:$0x1]
  %v954 = vperm.slane %v953, 0
  %v955 = vmul.f32 %v952, %v954
  %vm956 = vcmask 254976
  %v957 = vsel %vm956, %v955, 0.0
  %958 = vadd.xlane.f32.xlu0 %v957
  %v959 = vpop.xlane.xlu0 %958
  %v960 = vld [vmem:[%s6 + $0xd] sm:$0x1]
  %v961 = vperm.slane %v960, 0
  %v962 = vadd.f32 %v959, %v961
  %vm963 = vcmask 1024
  %964 = vst.msk [vmem:[%s7] sm:$0x3] %vm963, %v962
  // Predicated region
  $region30: #{tpu_custom_call.1} parent=0 // pred_check
    _
  $region31: #{tpu_custom_call.1} parent=0 // pred_check_branch
    %966 = sbr.rel (0) target = $region33
  $region32: #{tpu_custom_call.1} parent=0 // pred_region
    _
  $region33: #{tpu_custom_call.1} parent=0 // pred_fallthru
    _
  // Predicated region
  $region34: #{tpu_custom_call.1} parent=0 // pred_check
    _
  $region35: #{tpu_custom_call.1} parent=0 // pred_check_branch
    %968 = sbr.rel (0) target = $region37
  $region36: #{tpu_custom_call.1} parent=0 // pred_region
    _
  $region37: #{tpu_custom_call.1} parent=0 // pred_fallthru
    _

</llo_original>
